<compile_context>
chip_gen: v6e
topology: v6e:2x2x1
jax: 0.10.0
libtpu: 0.0.40
codegen_flags: <defaults>
</compile_context>

<pallas_src>
import jax
import jax.numpy as jnp
from jax import lax
from jax.experimental import pallas as pl
from jax.experimental.pallas import tpu as pltpu


# ---------------------------------------------------------------------------
# Pallas kernels: tiled (TM, K) @ (K, Cout) matmul + fused BN / residual / ReLU
# ---------------------------------------------------------------------------
def _matmul_bn_act_kernel(p_ref, w_ref, scale_ref, bias_ref, out_ref, acc_ref):
    k = pl.program_id(1)

    @pl.when(k == 0)
    def _():
        acc_ref[...] = jnp.zeros_like(acc_ref)

    acc_ref[...] += jnp.dot(
        p_ref[...], w_ref[...], preferred_element_type=jnp.float32
    )

    @pl.when(k == pl.num_programs(1) - 1)
    def _():
        y = acc_ref[...] * scale_ref[...] + bias_ref[...]
        out_ref[...] = jnp.maximum(y, 0.0).astype(out_ref.dtype)


def _matmul_bn_res_act_kernel(p_ref, w_ref, scale_ref, bias_ref, res_ref,
                              out_ref, acc_ref):
    k = pl.program_id(1)

    @pl.when(k == 0)
    def _():
        acc_ref[...] = jnp.zeros_like(acc_ref)

    acc_ref[...] += jnp.dot(
        p_ref[...], w_ref[...], preferred_element_type=jnp.float32
    )

    @pl.when(k == pl.num_programs(1) - 1)
    def _():
        y = acc_ref[...] * scale_ref[...] + bias_ref[...] + res_ref[...]
        out_ref[...] = jnp.maximum(y, 0.0).astype(out_ref.dtype)


# ---------------------------------------------------------------------------
# One conv3x3x3 + BN(eval) + (residual) + ReLU as a single pallas_call
# ---------------------------------------------------------------------------
def _round_up(x, m):
    return (x + m - 1) // m * m


def _conv3x3x3_bn_act(x_cl, w, scale, bias, residual=None,
                      out_dtype=jnp.float32):
    """x_cl: (N, D, H, W, Cin) channels-last.  Returns (M, Cout)."""
    N, D, H, W, Cin = x_cl.shape
    Cout = w.shape[0]
    M = N * D * H * W
    K = 27 * Cin

    # im2col in channels-last: (M, 27*Cin), tap-major / channel-minor.
    xp = jnp.pad(x_cl, ((0, 0), (1, 1), (1, 1), (1, 1), (0, 0)))
    cols = [xp[:, kd:kd + D, kh:kh + H, kw:kw + W, :]
            for kd in range(3) for kh in range(3) for kw in range(3)]
    patches = jnp.concatenate(cols, axis=-1).reshape(M, K)

    # (Cout, Cin, 3, 3, 3) -> (27*Cin, Cout), matching the tap order above.
    wmat = jnp.transpose(w, (2, 3, 4, 1, 0)).reshape(K, Cout)

    # --- tiling & padding: lane-dense output, fat MXU contraction ----------
    KMAX = 2048
    Kp = _round_up(K, 128)
    if Kp <= KMAX:
        TK = Kp
    else:
        Kp = _round_up(K, KMAX)
        TK = KMAX
    Np = _round_up(Cout, 128)
    TM = 1024 if M >= 1024 else _round_up(M, 8)
    Mp = _round_up(M, TM)
    nm, nk = Mp // TM, Kp // TK

    patches = jnp.pad(patches, ((0, Mp - M), (0, Kp - K))).astype(jnp.bfloat16)
    wmat = jnp.pad(wmat, ((0, Kp - K), (0, Np - Cout))).astype(jnp.bfloat16)
    scale_p = jnp.pad(scale.astype(jnp.float32), (0, Np - Cout)).reshape(1, Np)
    bias_p = jnp.pad(bias.astype(jnp.float32), (0, Np - Cout)).reshape(1, Np)

    in_specs = [
        pl.BlockSpec((TM, TK), lambda m, k: (m, k)),
        pl.BlockSpec((TK, Np), lambda m, k: (k, 0)),
        pl.BlockSpec((1, Np), lambda m, k: (0, 0)),
        pl.BlockSpec((1, Np), lambda m, k: (0, 0)),
    ]
    args = [patches, wmat, scale_p, bias_p]

    if residual is not None:
        res_p = jnp.pad(residual.astype(jnp.float32),
                        ((0, Mp - M), (0, Np - Cout)))
        in_specs.append(pl.BlockSpec((TM, Np), lambda m, k: (m, 0)))
        args.append(res_p)
        kernel = _matmul_bn_res_act_kernel
    else:
        kernel = _matmul_bn_act_kernel

    out_itemsize = jnp.dtype(out_dtype).itemsize
    cost = pl.CostEstimate(
        flops=2 * Mp * Kp * Np,
        transcendentals=0,
        bytes_accessed=(patches.size * 2 + wmat.size * 2 * nm
                        + Mp * Np * out_itemsize
                        + (Mp * Np * 4 if residual is not None else 0)),
    )

    out = pl.pallas_call(
        kernel,
        out_shape=jax.ShapeDtypeStruct((Mp, Np), out_dtype),
        grid_spec=pltpu.PrefetchScalarGridSpec(
            num_scalar_prefetch=0,
            grid=(nm, nk),
            in_specs=in_specs,
            out_specs=pl.BlockSpec((TM, Np), lambda m, k: (m, 0)),
            scratch_shapes=[pltpu.VMEM((TM, Np), jnp.float32)],
        ),
        compiler_params=pltpu.CompilerParams(
            dimension_semantics=("parallel", "arbitrary"),
        ),
        cost_estimate=cost,
    )(*args)

    return out[:M, :Cout]


# ---------------------------------------------------------------------------
# BasicBlock forward (stride=1, downsample=None -> requires inplanes == planes)
# ---------------------------------------------------------------------------
@jax.jit
def basic_block_forward(x, w1, w2, bn1_scale, bn1_bias, bn2_scale, bn2_bias):
    N, C, D, H, W = x.shape
    planes = w1.shape[0]
    M = N * D * H * W

    # NCDHW -> channels-last once, at the module boundary.
    x_cl = jnp.transpose(x, (0, 2, 3, 4, 1))                # (N, D, H, W, C)

    # conv1 + bn1 + relu : intermediate kept bf16, channels-last.
    out1 = _conv3x3x3_bn_act(x_cl, w1, bn1_scale, bn1_bias,
                             out_dtype=jnp.bfloat16)         # (M, planes)
    out1_cl = out1.reshape(N, D, H, W, planes)

    # conv2 + bn2 + residual + relu (residual = x, same channels-last rows).
    residual = x_cl.reshape(M, C)
    out2 = _conv3x3x3_bn_act(out1_cl, w2, bn2_scale, bn2_bias,
                             residual=residual, out_dtype=x.dtype)  # (M, planes)

    # channels-last -> NCDHW at the boundary.
    return jnp.transpose(out2.reshape(N, D, H, W, planes), (0, 4, 1, 2, 3))


# ---------------------------------------------------------------------------
# Pure-JAX reference for a sanity check
# ---------------------------------------------------------------------------
def _reference(x, w1, w2, s1, b1, s2, b2):
    dn = lax.conv_dimension_numbers(x.shape, w1.shape, ("NCDHW", "OIDHW", "NCDHW"))

    def conv(y, w):
        return lax.conv_general_dilated(
            y, w, (1, 1, 1), [(1, 1)] * 3, dimension_numbers=dn,
            precision=lax.Precision.HIGHEST)

    def bn(y, s, b):
        return y * s.reshape(1, -1, 1, 1, 1) + b.reshape(1, -1, 1, 1, 1)

    out = jnp.maximum(bn(conv(x, w1), s1, b1), 0.0)
    out = bn(conv(out, w2), s2, b2)
    return jnp.maximum(out + x, 0.0)


# ---------------------------------------------------------------------------
if __name__ == "__main__":
    key = jax.random.PRNGKey(0)
    ks = jax.random.split(key, 11)

    # Small shapes: batch=2, inplanes=planes=4 (residual add valid with
    # downsample=None), depth=4, spatial 8x8.
    N, C, D, H, W = 2, 4, 4, 8, 8
    planes = C
    eps = 1e-5

    x = jax.random.normal(ks[0], (N, C, D, H, W), jnp.float32)

    # conv weights (PyTorch layout: out, in, kD, kH, kW), no bias.
    w1 = 0.1 * jax.random.normal(ks[1], (planes, C, 3, 3, 3), jnp.float32)
    w2 = 0.1 * jax.random.normal(ks[2], (planes, planes, 3, 3, 3), jnp.float32)

    # BatchNorm3d params / running stats (eval-mode), deterministic.
    g1 = 1.0 + 0.1 * jax.random.normal(ks[3], (planes,), jnp.float32)
    be1 = 0.1 * jax.random.normal(ks[4], (planes,), jnp.float32)
    m1 = 0.1 * jax.random.normal(ks[5], (planes,), jnp.float32)
    v1 = 0.5 + jax.random.uniform(ks[6], (planes,), jnp.float32)
    g2 = 1.0 + 0.1 * jax.random.normal(ks[7], (planes,), jnp.float32)
    be2 = 0.1 * jax.random.normal(ks[8], (planes,), jnp.float32)
    m2 = 0.1 * jax.random.normal(ks[9], (planes,), jnp.float32)
    v2 = 0.5 + jax.random.uniform(ks[10], (planes,), jnp.float32)

    # Fold BN (eval) into per-channel scale/bias.
    s1 = g1 / jnp.sqrt(v1 + eps)
    b1 = be1 - m1 * s1
    s2 = g2 / jnp.sqrt(v2 + eps)
    b2 = be2 - m2 * s2

    out = basic_block_forward(x, w1, w2, s1, b1, s2, b2)
    out = jax.block_until_ready(out)

    assert out.shape == x.shape, (out.shape, x.shape)
    assert bool(jnp.all(jnp.isfinite(out)))

    # Tolerance reflects bf16 MXU inputs + bf16 intermediate activation vs a
    # full-f32 HIGHEST-precision reference.
    ref = _reference(x, w1, w2, s1, b1, s2, b2)
    max_err = float(jnp.max(jnp.abs(out - ref)))
    assert bool(jnp.allclose(out, ref, atol=3e-2, rtol=3e-2)), max_err

    print("KERNEL_OK")
</pallas_src>

<mosaic_0001>
module attributes {stable_mosaic.version = 11 : i64} {
  func.func @_matmul_bn_act_kernel(%arg0: i32, %arg1: i32, %arg2: memref<512x128xbf16, #tpu.memory_space<vmem>>, %arg3: memref<128x128xbf16, #tpu.memory_space<vmem>>, %arg4: memref<1x128xf32, #tpu.memory_space<vmem>>, %arg5: memref<1x128xf32, #tpu.memory_space<vmem>>, %arg6: memref<512x128xbf16, #tpu.memory_space<vmem>>, %arg7: memref<512x128xf32, #tpu.memory_space<vmem>>) attributes {dimension_semantics = [#tpu.dimension_semantics<parallel>, #tpu.dimension_semantics<arbitrary>], iteration_bounds = array<i64: 1, 1>, scalar_prefetch = 0 : i64, scratch_operands = 1 : i64, tpu.core_type = #tpu.core_type<tc>, window_params = [{transform_indices = @transform_0, window_bounds = array<i64: 512, 128>}, {transform_indices = @transform_1, window_bounds = array<i64: 128, 128>}, {pipeline_mode = #tpu.pipeline_mode<synchronous>, transform_indices = @transform_2, window_bounds = array<i64: 1, 128>}, {pipeline_mode = #tpu.pipeline_mode<synchronous>, transform_indices = @transform_3, window_bounds = array<i64: 1, 128>}, {transform_indices = @transform_4, window_bounds = array<i64: 512, 128>}]} {
    %c0_i32 = arith.constant 0 : i32
    %0 = arith.cmpi eq, %arg1, %c0_i32 : i32
    %1 = arith.extui %0 : i1 to i32
    %c0_i32_0 = arith.constant 0 : i32
    %2 = arith.cmpi ne, %1, %c0_i32_0 : i32
    scf.if %2 {
      %cst_10 = arith.constant 0.000000e+00 : f32
      %12 = vector.broadcast %cst_10 : f32 to vector<512x128xf32>
      %c0_11 = arith.constant 0 : index
      %c0_12 = arith.constant 0 : index
      %13 = vector.load %arg7[%c0_11, %c0_12] : memref<512x128xf32, #tpu.memory_space<vmem>>, vector<512x128xf32>
      tpu.vector_store %arg7[%c0_11, %c0_12], %12 {strides = array<i32>} : memref<512x128xf32, #tpu.memory_space<vmem>>, vector<512x128xf32>,
    } else {
    }
    %c0 = arith.constant 0 : index
    %c0_1 = arith.constant 0 : index
    %3 = vector.load %arg7[%c0, %c0_1] : memref<512x128xf32, #tpu.memory_space<vmem>>, vector<512x128xf32>
    %c0_2 = arith.constant 0 : index
    %c0_3 = arith.constant 0 : index
    %4 = vector.load %arg2[%c0_2, %c0_3] : memref<512x128xbf16, #tpu.memory_space<vmem>>, vector<512x128xbf16>
    %c0_4 = arith.constant 0 : index
    %c0_5 = arith.constant 0 : index
    %5 = vector.load %arg3[%c0_4, %c0_5] : memref<128x128xbf16, #tpu.memory_space<vmem>>, vector<128x128xbf16>
    %cst = arith.constant dense<0.000000e+00> : vector<512x128xf32>
    %6 = tpu.matmul %4, %5, %cst {dimension_numbers = #tpu.dot_dimension_numbers<[1], [0], [0], [1], [0, 0, 1, 1], [], []>} : vector<512x128xbf16>, vector<128x128xbf16>, vector<512x128xf32> -> vector<512x128xf32>
    %7 = arith.addf %3, %6 : vector<512x128xf32>
    %c0_6 = arith.constant 0 : index
    %c0_7 = arith.constant 0 : index
    %8 = vector.load %arg7[%c0_6, %c0_7] : memref<512x128xf32, #tpu.memory_space<vmem>>, vector<512x128xf32>
    tpu.vector_store %arg7[%c0_6, %c0_7], %7 {strides = array<i32>} : memref<512x128xf32, #tpu.memory_space<vmem>>, vector<512x128xf32>,
    %c0_i32_8 = arith.constant 0 : i32
    %9 = arith.cmpi eq, %arg1, %c0_i32_8 : i32
    %10 = arith.extui %9 : i1 to i32
    %c0_i32_9 = arith.constant 0 : i32
    %11 = arith.cmpi ne, %10, %c0_i32_9 : i32
    scf.if %11 {
      %c0_10 = arith.constant 0 : index
      %c0_11 = arith.constant 0 : index
      %12 = vector.load %arg7[%c0_10, %c0_11] : memref<512x128xf32, #tpu.memory_space<vmem>>, vector<512x128xf32>
      %c0_12 = arith.constant 0 : index
      %c0_13 = arith.constant 0 : index
      %13 = vector.load %arg4[%c0_12, %c0_13] : memref<1x128xf32, #tpu.memory_space<vmem>>, vector<1x128xf32>
      %14 = vector.broadcast %13 : vector<1x128xf32> to vector<512x128xf32>
      %15 = arith.mulf %12, %14 : vector<512x128xf32>
      %c0_14 = arith.constant 0 : index
      %c0_15 = arith.constant 0 : index
      %16 = vector.load %arg5[%c0_14, %c0_15] : memref<1x128xf32, #tpu.memory_space<vmem>>, vector<1x128xf32>
      %17 = vector.broadcast %16 : vector<1x128xf32> to vector<512x128xf32>
      %18 = arith.addf %15, %17 : vector<512x128xf32>
      %cst_16 = arith.constant 0.000000e+00 : f32
      %19 = vector.broadcast %cst_16 : f32 to vector<512x128xf32>
      %20 = arith.maximumf %18, %19 : vector<512x128xf32>
      %21 = arith.truncf %20 : vector<512x128xf32> to vector<512x128xbf16>
      %c0_17 = arith.constant 0 : index
      %c0_18 = arith.constant 0 : index
      %22 = vector.load %arg6[%c0_17, %c0_18] : memref<512x128xbf16, #tpu.memory_space<vmem>>, vector<512x128xbf16>
      tpu.vector_store %arg6[%c0_17, %c0_18], %21 {strides = array<i32>} : memref<512x128xbf16, #tpu.memory_space<vmem>>, vector<512x128xbf16>,
    } else {
    }
    return
  }
  func.func @transform_0(%arg0: i32, %arg1: i32) -> (i32, i32) {
    %c0_i32 = arith.constant 0 : i32
    return %arg0, %arg1 : i32, i32
  }
  func.func @transform_1(%arg0: i32, %arg1: i32) -> (i32, i32) {
    %c0_i32 = arith.constant 0 : i32
    %c0_i32_0 = arith.constant 0 : i32
    return %arg1, %c0_i32 : i32, i32
  }
  func.func @transform_2(%arg0: i32, %arg1: i32) -> (i32, i32) {
    %c0_i32 = arith.constant 0 : i32
    %c0_i32_0 = arith.constant 0 : i32
    %c0_i32_1 = arith.constant 0 : i32
    return %c0_i32, %c0_i32_0 : i32, i32
  }
  func.func @transform_3(%arg0: i32, %arg1: i32) -> (i32, i32) {
    %c0_i32 = arith.constant 0 : i32
    %c0_i32_0 = arith.constant 0 : i32
    %c0_i32_1 = arith.constant 0 : i32
    return %c0_i32, %c0_i32_0 : i32, i32
  }
  func.func @transform_4(%arg0: i32, %arg1: i32) -> (i32, i32) {
    %c0_i32 = arith.constant 0 : i32
    %c0_i32_0 = arith.constant 0 : i32
    return %arg0, %c0_i32 : i32, i32
  }
}

module attributes {stable_mosaic.version = 11 : i64} {
  func.func @_matmul_bn_res_act_kernel(%arg0: i32, %arg1: i32, %arg2: memref<512x128xbf16, #tpu.memory_space<vmem>>, %arg3: memref<128x128xbf16, #tpu.memory_space<vmem>>, %arg4: memref<1x128xf32, #tpu.memory_space<vmem>>, %arg5: memref<1x128xf32, #tpu.memory_space<vmem>>, %arg6: memref<512x128xf32, #tpu.memory_space<vmem>>, %arg7: memref<512x128xf32, #tpu.memory_space<vmem>>, %arg8: memref<512x128xf32, #tpu.memory_space<vmem>>) attributes {dimension_semantics = [#tpu.dimension_semantics<parallel>, #tpu.dimension_semantics<arbitrary>], iteration_bounds = array<i64: 1, 1>, scalar_prefetch = 0 : i64, scratch_operands = 1 : i64, tpu.core_type = #tpu.core_type<tc>, window_params = [{transform_indices = @transform_0, window_bounds = array<i64: 512, 128>}, {transform_indices = @transform_1, window_bounds = array<i64: 128, 128>}, {pipeline_mode = #tpu.pipeline_mode<synchronous>, transform_indices = @transform_2, window_bounds = array<i64: 1, 128>}, {pipeline_mode = #tpu.pipeline_mode<synchronous>, transform_indices = @transform_3, window_bounds = array<i64: 1, 128>}, {transform_indices = @transform_4, window_bounds = array<i64: 512, 128>}, {transform_indices = @transform_5, window_bounds = array<i64: 512, 128>}]} {
    %c0_i32 = arith.constant 0 : i32
    %0 = arith.cmpi eq, %arg1, %c0_i32 : i32
    %1 = arith.extui %0 : i1 to i32
    %c0_i32_0 = arith.constant 0 : i32
    %2 = arith.cmpi ne, %1, %c0_i32_0 : i32
    scf.if %2 {
      %cst_10 = arith.constant 0.000000e+00 : f32
      %12 = vector.broadcast %cst_10 : f32 to vector<512x128xf32>
      %c0_11 = arith.constant 0 : index
      %c0_12 = arith.constant 0 : index
      %13 = vector.load %arg8[%c0_11, %c0_12] : memref<512x128xf32, #tpu.memory_space<vmem>>, vector<512x128xf32>
      tpu.vector_store %arg8[%c0_11, %c0_12], %12 {strides = array<i32>} : memref<512x128xf32, #tpu.memory_space<vmem>>, vector<512x128xf32>,
    } else {
    }
    %c0 = arith.constant 0 : index
    %c0_1 = arith.constant 0 : index
    %3 = vector.load %arg8[%c0, %c0_1] : memref<512x128xf32, #tpu.memory_space<vmem>>, vector<512x128xf32>
    %c0_2 = arith.constant 0 : index
    %c0_3 = arith.constant 0 : index
    %4 = vector.load %arg2[%c0_2, %c0_3] : memref<512x128xbf16, #tpu.memory_space<vmem>>, vector<512x128xbf16>
    %c0_4 = arith.constant 0 : index
    %c0_5 = arith.constant 0 : index
    %5 = vector.load %arg3[%c0_4, %c0_5] : memref<128x128xbf16, #tpu.memory_space<vmem>>, vector<128x128xbf16>
    %cst = arith.constant dense<0.000000e+00> : vector<512x128xf32>
    %6 = tpu.matmul %4, %5, %cst {dimension_numbers = #tpu.dot_dimension_numbers<[1], [0], [0], [1], [0, 0, 1, 1], [], []>} : vector<512x128xbf16>, vector<128x128xbf16>, vector<512x128xf32> -> vector<512x128xf32>
    %7 = arith.addf %3, %6 : vector<512x128xf32>
    %c0_6 = arith.constant 0 : index
    %c0_7 = arith.constant 0 : index
    %8 = vector.load %arg8[%c0_6, %c0_7] : memref<512x128xf32, #tpu.memory_space<vmem>>, vector<512x128xf32>
    tpu.vector_store %arg8[%c0_6, %c0_7], %7 {strides = array<i32>} : memref<512x128xf32, #tpu.memory_space<vmem>>, vector<512x128xf32>,
    %c0_i32_8 = arith.constant 0 : i32
    %9 = arith.cmpi eq, %arg1, %c0_i32_8 : i32
    %10 = arith.extui %9 : i1 to i32
    %c0_i32_9 = arith.constant 0 : i32
    %11 = arith.cmpi ne, %10, %c0_i32_9 : i32
    scf.if %11 {
      %c0_10 = arith.constant 0 : index
      %c0_11 = arith.constant 0 : index
      %12 = vector.load %arg8[%c0_10, %c0_11] : memref<512x128xf32, #tpu.memory_space<vmem>>, vector<512x128xf32>
      %c0_12 = arith.constant 0 : index
      %c0_13 = arith.constant 0 : index
      %13 = vector.load %arg4[%c0_12, %c0_13] : memref<1x128xf32, #tpu.memory_space<vmem>>, vector<1x128xf32>
      %14 = vector.broadcast %13 : vector<1x128xf32> to vector<512x128xf32>
      %15 = arith.mulf %12, %14 : vector<512x128xf32>
      %c0_14 = arith.constant 0 : index
      %c0_15 = arith.constant 0 : index
      %16 = vector.load %arg5[%c0_14, %c0_15] : memref<1x128xf32, #tpu.memory_space<vmem>>, vector<1x128xf32>
      %17 = vector.broadcast %16 : vector<1x128xf32> to vector<512x128xf32>
      %18 = arith.addf %15, %17 : vector<512x128xf32>
      %c0_16 = arith.constant 0 : index
      %c0_17 = arith.constant 0 : index
      %19 = vector.load %arg6[%c0_16, %c0_17] : memref<512x128xf32, #tpu.memory_space<vmem>>, vector<512x128xf32>
      %20 = arith.addf %18, %19 : vector<512x128xf32>
      %cst_18 = arith.constant 0.000000e+00 : f32
      %21 = vector.broadcast %cst_18 : f32 to vector<512x128xf32>
      %22 = arith.maximumf %20, %21 : vector<512x128xf32>
      %c0_19 = arith.constant 0 : index
      %c0_20 = arith.constant 0 : index
      %23 = vector.load %arg7[%c0_19, %c0_20] : memref<512x128xf32, #tpu.memory_space<vmem>>, vector<512x128xf32>
      tpu.vector_store %arg7[%c0_19, %c0_20], %22 {strides = array<i32>} : memref<512x128xf32, #tpu.memory_space<vmem>>, vector<512x128xf32>,
    } else {
    }
    return
  }
  func.func @transform_0(%arg0: i32, %arg1: i32) -> (i32, i32) {
    %c0_i32 = arith.constant 0 : i32
    return %arg0, %arg1 : i32, i32
  }
  func.func @transform_1(%arg0: i32, %arg1: i32) -> (i32, i32) {
    %c0_i32 = arith.constant 0 : i32
    %c0_i32_0 = arith.constant 0 : i32
    return %arg1, %c0_i32 : i32, i32
  }
  func.func @transform_2(%arg0: i32, %arg1: i32) -> (i32, i32) {
    %c0_i32 = arith.constant 0 : i32
    %c0_i32_0 = arith.constant 0 : i32
    %c0_i32_1 = arith.constant 0 : i32
    return %c0_i32, %c0_i32_0 : i32, i32
  }
  func.func @transform_3(%arg0: i32, %arg1: i32) -> (i32, i32) {
    %c0_i32 = arith.constant 0 : i32
    %c0_i32_0 = arith.constant 0 : i32
    %c0_i32_1 = arith.constant 0 : i32
    return %c0_i32, %c0_i32_0 : i32, i32
  }
  func.func @transform_4(%arg0: i32, %arg1: i32) -> (i32, i32) {
    %c0_i32 = arith.constant 0 : i32
    %c0_i32_0 = arith.constant 0 : i32
    return %arg0, %c0_i32 : i32, i32
  }
  func.func @transform_5(%arg0: i32, %arg1: i32) -> (i32, i32) {
    %c0_i32 = arith.constant 0 : i32
    %c0_i32_0 = arith.constant 0 : i32
    return %arg0, %c0_i32 : i32, i32
  }
}

</mosaic_0001>

<llo_original>
// kernel: basic_block_forward.2
$region0: #{basic_block_forward.2}
  #allocation0 [shape = 'u32[]', space=smem, size = 0x4, offset = 0x4, fixed_abs, tag = 'smem constant byte address 0x4 - core index']
  #allocation1 [shape = 'u32[144,128]{1,0:T(1,128)}', space=vmem, size = 0x12000, scoped, tag = 'internal scratch']
  #allocation2 [shape = 'f32[512,128]{1,0:T(8,128)}', space=vmem, size = 0x40000, scoped, tag = 'scratch operand']
  %s0 = inlined_call_operand.vmem [shape: bf16[512,128], index: 0, kind: input, shape index: {}]
  %s1 = inlined_call_operand.vmem [shape: bf16[128,128], index: 1, kind: input, shape index: {}]
  %s2 = inlined_call_operand.vmem [shape: f32[1,128], index: 2, kind: input, shape index: {}]
  %s3 = inlined_call_operand.vmem [shape: f32[1,128], index: 3, kind: input, shape index: {}]
  %s4 = inlined_call_operand.vmem [shape: bf16[512,128], index: 4, kind: output, shape index: {}]
  %s5 = sld [smem:[#allocation0]]
  $region34: #{basic_block_forward.2} parent=0
    _
  %s7 = ssub.s32 1, %s5
  %s8 = scalar_select 0, %s7, %s5
  // Predicated region
  $region2: #{basic_block_forward.2} parent=0 // pred_check
    _
  $region3: #{basic_block_forward.2} parent=0 // pred_check_branch
    %10 = sbr.rel (0) target = $region5
  $region4: #{basic_block_forward.2} parent=0 // pred_region
    _
  $region5: #{basic_block_forward.2} parent=0 // pred_fallthru
    _
  // Predicated region
  $region6: #{basic_block_forward.2} parent=0 // pred_check
    _
  $region7: #{basic_block_forward.2} parent=0 // pred_check_branch
    %12 = sbr.rel (0) target = $region9
  $region8: #{basic_block_forward.2} parent=0 // pred_region
    _
  $region9: #{basic_block_forward.2} parent=0 // pred_fallthru
    _
  // Predicated region
  $region10: #{basic_block_forward.2} parent=0 // pred_check
    _
  $region11: #{basic_block_forward.2} parent=0 // pred_check_branch
    %14 = sbr.rel (0) target = $region13
  $region12: #{basic_block_forward.2} parent=0 // pred_region
    _
  $region13: #{basic_block_forward.2} parent=0 // pred_fallthru
    _
  // Predicated region
  $region14: #{basic_block_forward.2} parent=0 // pred_check
    _
  $region15: #{basic_block_forward.2} parent=0 // pred_check_branch
    %16 = sbr.rel (0) target = $region17
  $region16: #{basic_block_forward.2} parent=0 // pred_region
    _
  $region17: #{basic_block_forward.2} parent=0 // pred_fallthru
    _
  %p18 = scmp.eq.s32.totalorder 0, 0
  // Predicated region
  $region18: #{basic_block_forward.2} parent=0 // pred_check
    %p19 = pneg %p18
  $region19: #{basic_block_forward.2} parent=0 // pred_check_branch
    %21 = sbr.rel (%p19) target = $region21
  $region20: #{basic_block_forward.2} parent=0 // pred_region
    %22 = vst [vmem:[#allocation2] sm:$0xff] 0.0
    %23 = vst [vmem:[#allocation2 + $0x8] sm:$0xff] 0.0
    %24 = vst [vmem:[#allocation2 + $0x10] sm:$0xff] 0.0
    %25 = vst [vmem:[#allocation2 + $0x18] sm:$0xff] 0.0
    %26 = vst [vmem:[#allocation2 + $0x20] sm:$0xff] 0.0
    %27 = vst [vmem:[#allocation2 + $0x28] sm:$0xff] 0.0
    %28 = vst [vmem:[#allocation2 + $0x30] sm:$0xff] 0.0
    %29 = vst [vmem:[#allocation2 + $0x38] sm:$0xff] 0.0
    %30 = vst [vmem:[#allocation2 + $0x40] sm:$0xff] 0.0
    %31 = vst [vmem:[#allocation2 + $0x48] sm:$0xff] 0.0
    %32 = vst [vmem:[#allocation2 + $0x50] sm:$0xff] 0.0
    %33 = vst [vmem:[#allocation2 + $0x58] sm:$0xff] 0.0
    %34 = vst [vmem:[#allocation2 + $0x60] sm:$0xff] 0.0
    %35 = vst [vmem:[#allocation2 + $0x68] sm:$0xff] 0.0
    %36 = vst [vmem:[#allocation2 + $0x70] sm:$0xff] 0.0
    %37 = vst [vmem:[#allocation2 + $0x78] sm:$0xff] 0.0
    %38 = vst [vmem:[#allocation2 + $0x80] sm:$0xff] 0.0
    %39 = vst [vmem:[#allocation2 + $0x88] sm:$0xff] 0.0
    %40 = vst [vmem:[#allocation2 + $0x90] sm:$0xff] 0.0
    %41 = vst [vmem:[#allocation2 + $0x98] sm:$0xff] 0.0
    %42 = vst [vmem:[#allocation2 + $0xa0] sm:$0xff] 0.0
    %43 = vst [vmem:[#allocation2 + $0xa8] sm:$0xff] 0.0
    %44 = vst [vmem:[#allocation2 + $0xb0] sm:$0xff] 0.0
    %45 = vst [vmem:[#allocation2 + $0xb8] sm:$0xff] 0.0
    %46 = vst [vmem:[#allocation2 + $0xc0] sm:$0xff] 0.0
    %47 = vst [vmem:[#allocation2 + $0xc8] sm:$0xff] 0.0
    %48 = vst [vmem:[#allocation2 + $0xd0] sm:$0xff] 0.0
    %49 = vst [vmem:[#allocation2 + $0xd8] sm:$0xff] 0.0
    %50 = vst [vmem:[#allocation2 + $0xe0] sm:$0xff] 0.0
    %51 = vst [vmem:[#allocation2 + $0xe8] sm:$0xff] 0.0
    %52 = vst [vmem:[#allocation2 + $0xf0] sm:$0xff] 0.0
    %53 = vst [vmem:[#allocation2 + $0xf8] sm:$0xff] 0.0
    %54 = vst [vmem:[#allocation2 + $0x100] sm:$0xff] 0.0
    %55 = vst [vmem:[#allocation2 + $0x108] sm:$0xff] 0.0
    %56 = vst [vmem:[#allocation2 + $0x110] sm:$0xff] 0.0
    %57 = vst [vmem:[#allocation2 + $0x118] sm:$0xff] 0.0
    %58 = vst [vmem:[#allocation2 + $0x120] sm:$0xff] 0.0
    %59 = vst [vmem:[#allocation2 + $0x128] sm:$0xff] 0.0
    %60 = vst [vmem:[#allocation2 + $0x130] sm:$0xff] 0.0
    %61 = vst [vmem:[#allocation2 + $0x138] sm:$0xff] 0.0
    %62 = vst [vmem:[#allocation2 + $0x140] sm:$0xff] 0.0
    %63 = vst [vmem:[#allocation2 + $0x148] sm:$0xff] 0.0
    %64 = vst [vmem:[#allocation2 + $0x150] sm:$0xff] 0.0
    %65 = vst [vmem:[#allocation2 + $0x158] sm:$0xff] 0.0
    %66 = vst [vmem:[#allocation2 + $0x160] sm:$0xff] 0.0
    %67 = vst [vmem:[#allocation2 + $0x168] sm:$0xff] 0.0
    %68 = vst [vmem:[#allocation2 + $0x170] sm:$0xff] 0.0
    %69 = vst [vmem:[#allocation2 + $0x178] sm:$0xff] 0.0
    %70 = vst [vmem:[#allocation2 + $0x180] sm:$0xff] 0.0
    %71 = vst [vmem:[#allocation2 + $0x188] sm:$0xff] 0.0
    %72 = vst [vmem:[#allocation2 + $0x190] sm:$0xff] 0.0
    %73 = vst [vmem:[#allocation2 + $0x198] sm:$0xff] 0.0
    %74 = vst [vmem:[#allocation2 + $0x1a0] sm:$0xff] 0.0
    %75 = vst [vmem:[#allocation2 + $0x1a8] sm:$0xff] 0.0
    %76 = vst [vmem:[#allocation2 + $0x1b0] sm:$0xff] 0.0
    %77 = vst [vmem:[#allocation2 + $0x1b8] sm:$0xff] 0.0
    %78 = vst [vmem:[#allocation2 + $0x1c0] sm:$0xff] 0.0
    %79 = vst [vmem:[#allocation2 + $0x1c8] sm:$0xff] 0.0
    %80 = vst [vmem:[#allocation2 + $0x1d0] sm:$0xff] 0.0
    %81 = vst [vmem:[#allocation2 + $0x1d8] sm:$0xff] 0.0
    %82 = vst [vmem:[#allocation2 + $0x1e0] sm:$0xff] 0.0
    %83 = vst [vmem:[#allocation2 + $0x1e8] sm:$0xff] 0.0
    %84 = vst [vmem:[#allocation2 + $0x1f0] sm:$0xff] 0.0
    %85 = vst [vmem:[#allocation2 + $0x1f8] sm:$0xff] 0.0
  $region21: #{basic_block_forward.2} parent=0 // pred_fallthru
    _
  %v86 = vld [vmem:[#allocation2] sm:$0xff]
  %v87 = vld [vmem:[#allocation2 + $0x8] sm:$0xff]
  %v88 = vld [vmem:[#allocation2 + $0x10] sm:$0xff]
  %v89 = vld [vmem:[#allocation2 + $0x18] sm:$0xff]
  %v90 = vld [vmem:[#allocation2 + $0x20] sm:$0xff]
  %v91 = vld [vmem:[#allocation2 + $0x28] sm:$0xff]
  %v92 = vld [vmem:[#allocation2 + $0x30] sm:$0xff]
  %v93 = vld [vmem:[#allocation2 + $0x38] sm:$0xff]
  %v94 = vld [vmem:[#allocation2 + $0x40] sm:$0xff]
  %v95 = vld [vmem:[#allocation2 + $0x48] sm:$0xff]
  %v96 = vld [vmem:[#allocation2 + $0x50] sm:$0xff]
  %v97 = vld [vmem:[#allocation2 + $0x58] sm:$0xff]
  %v98 = vld [vmem:[#allocation2 + $0x60] sm:$0xff]
  %v99 = vld [vmem:[#allocation2 + $0x68] sm:$0xff]
  %v100 = vld [vmem:[#allocation2 + $0x70] sm:$0xff]
  %v101 = vld [vmem:[#allocation2 + $0x78] sm:$0xff]
  %v102 = vld [vmem:[#allocation2 + $0x80] sm:$0xff]
  %v103 = vld [vmem:[#allocation2 + $0x88] sm:$0xff]
  %v104 = vld [vmem:[#allocation2 + $0x90] sm:$0xff]
  %v105 = vld [vmem:[#allocation2 + $0x98] sm:$0xff]
  %v106 = vld [vmem:[#allocation2 + $0xa0] sm:$0xff]
  %v107 = vld [vmem:[#allocation2 + $0xa8] sm:$0xff]
  %v108 = vld [vmem:[#allocation2 + $0xb0] sm:$0xff]
  %v109 = vld [vmem:[#allocation2 + $0xb8] sm:$0xff]
  %v110 = vld [vmem:[#allocation2 + $0xc0] sm:$0xff]
  %v111 = vld [vmem:[#allocation2 + $0xc8] sm:$0xff]
  %v112 = vld [vmem:[#allocation2 + $0xd0] sm:$0xff]
  %v113 = vld [vmem:[#allocation2 + $0xd8] sm:$0xff]
  %v114 = vld [vmem:[#allocation2 + $0xe0] sm:$0xff]
  %v115 = vld [vmem:[#allocation2 + $0xe8] sm:$0xff]
  %v116 = vld [vmem:[#allocation2 + $0xf0] sm:$0xff]
  %v117 = vld [vmem:[#allocation2 + $0xf8] sm:$0xff]
  %v118 = vld [vmem:[#allocation2 + $0x100] sm:$0xff]
  %v119 = vld [vmem:[#allocation2 + $0x108] sm:$0xff]
  %v120 = vld [vmem:[#allocation2 + $0x110] sm:$0xff]
  %v121 = vld [vmem:[#allocation2 + $0x118] sm:$0xff]
  %v122 = vld [vmem:[#allocation2 + $0x120] sm:$0xff]
  %v123 = vld [vmem:[#allocation2 + $0x128] sm:$0xff]
  %v124 = vld [vmem:[#allocation2 + $0x130] sm:$0xff]
  %v125 = vld [vmem:[#allocation2 + $0x138] sm:$0xff]
  %v126 = vld [vmem:[#allocation2 + $0x140] sm:$0xff]
  %v127 = vld [vmem:[#allocation2 + $0x148] sm:$0xff]
  %v128 = vld [vmem:[#allocation2 + $0x150] sm:$0xff]
  %v129 = vld [vmem:[#allocation2 + $0x158] sm:$0xff]
  %v130 = vld [vmem:[#allocation2 + $0x160] sm:$0xff]
  %v131 = vld [vmem:[#allocation2 + $0x168] sm:$0xff]
  %v132 = vld [vmem:[#allocation2 + $0x170] sm:$0xff]
  %v133 = vld [vmem:[#allocation2 + $0x178] sm:$0xff]
  %v134 = vld [vmem:[#allocation2 + $0x180] sm:$0xff]
  %v135 = vld [vmem:[#allocation2 + $0x188] sm:$0xff]
  %v136 = vld [vmem:[#allocation2 + $0x190] sm:$0xff]
  %v137 = vld [vmem:[#allocation2 + $0x198] sm:$0xff]
  %v138 = vld [vmem:[#allocation2 + $0x1a0] sm:$0xff]
  %v139 = vld [vmem:[#allocation2 + $0x1a8] sm:$0xff]
  %v140 = vld [vmem:[#allocation2 + $0x1b0] sm:$0xff]
  %v141 = vld [vmem:[#allocation2 + $0x1b8] sm:$0xff]
  %v142 = vld [vmem:[#allocation2 + $0x1c0] sm:$0xff]
  %v143 = vld [vmem:[#allocation2 + $0x1c8] sm:$0xff]
  %v144 = vld [vmem:[#allocation2 + $0x1d0] sm:$0xff]
  %v145 = vld [vmem:[#allocation2 + $0x1d8] sm:$0xff]
  %v146 = vld [vmem:[#allocation2 + $0x1e0] sm:$0xff]
  %v147 = vld [vmem:[#allocation2 + $0x1e8] sm:$0xff]
  %v148 = vld [vmem:[#allocation2 + $0x1f0] sm:$0xff]
  %v149 = vld [vmem:[#allocation2 + $0x1f8] sm:$0xff]
  %v150 = vld [vmem:[%s0] sm:$0xf]
  %v151 = vld [vmem:[%s0 + $0x4] sm:$0xf]
  %v152 = vld [vmem:[%s0 + $0x8] sm:$0xf]
  %v153 = vld [vmem:[%s0 + $0xc] sm:$0xf]
  %v154 = vld [vmem:[%s0 + $0x10] sm:$0xf]
  %v155 = vld [vmem:[%s0 + $0x14] sm:$0xf]
  %v156 = vld [vmem:[%s0 + $0x18] sm:$0xf]
  %v157 = vld [vmem:[%s0 + $0x1c] sm:$0xf]
  %v158 = vld [vmem:[%s0 + $0x20] sm:$0xf]
  %v159 = vld [vmem:[%s0 + $0x24] sm:$0xf]
  %v160 = vld [vmem:[%s0 + $0x28] sm:$0xf]
  %v161 = vld [vmem:[%s0 + $0x2c] sm:$0xf]
  %v162 = vld [vmem:[%s0 + $0x30] sm:$0xf]
  %v163 = vld [vmem:[%s0 + $0x34] sm:$0xf]
  %v164 = vld [vmem:[%s0 + $0x38] sm:$0xf]
  %v165 = vld [vmem:[%s0 + $0x3c] sm:$0xf]
  %v166 = vld [vmem:[%s0 + $0x40] sm:$0xf]
  %v167 = vld [vmem:[%s0 + $0x44] sm:$0xf]
  %v168 = vld [vmem:[%s0 + $0x48] sm:$0xf]
  %v169 = vld [vmem:[%s0 + $0x4c] sm:$0xf]
  %v170 = vld [vmem:[%s0 + $0x50] sm:$0xf]
  %v171 = vld [vmem:[%s0 + $0x54] sm:$0xf]
  %v172 = vld [vmem:[%s0 + $0x58] sm:$0xf]
  %v173 = vld [vmem:[%s0 + $0x5c] sm:$0xf]
  %v174 = vld [vmem:[%s0 + $0x60] sm:$0xf]
  %v175 = vld [vmem:[%s0 + $0x64] sm:$0xf]
  %v176 = vld [vmem:[%s0 + $0x68] sm:$0xf]
  %v177 = vld [vmem:[%s0 + $0x6c] sm:$0xf]
  %v178 = vld [vmem:[%s0 + $0x70] sm:$0xf]
  %v179 = vld [vmem:[%s0 + $0x74] sm:$0xf]
  %v180 = vld [vmem:[%s0 + $0x78] sm:$0xf]
  %v181 = vld [vmem:[%s0 + $0x7c] sm:$0xf]
  %v182 = vld [vmem:[%s0 + $0x80] sm:$0xf]
  %v183 = vld [vmem:[%s0 + $0x84] sm:$0xf]
  %v184 = vld [vmem:[%s0 + $0x88] sm:$0xf]
  %v185 = vld [vmem:[%s0 + $0x8c] sm:$0xf]
  %v186 = vld [vmem:[%s0 + $0x90] sm:$0xf]
  %v187 = vld [vmem:[%s0 + $0x94] sm:$0xf]
  %v188 = vld [vmem:[%s0 + $0x98] sm:$0xf]
  %v189 = vld [vmem:[%s0 + $0x9c] sm:$0xf]
  %v190 = vld [vmem:[%s0 + $0xa0] sm:$0xf]
  %v191 = vld [vmem:[%s0 + $0xa4] sm:$0xf]
  %v192 = vld [vmem:[%s0 + $0xa8] sm:$0xf]
  %v193 = vld [vmem:[%s0 + $0xac] sm:$0xf]
  %v194 = vld [vmem:[%s0 + $0xb0] sm:$0xf]
  %v195 = vld [vmem:[%s0 + $0xb4] sm:$0xf]
  %v196 = vld [vmem:[%s0 + $0xb8] sm:$0xf]
  %v197 = vld [vmem:[%s0 + $0xbc] sm:$0xf]
  %v198 = vld [vmem:[%s0 + $0xc0] sm:$0xf]
  %v199 = vld [vmem:[%s0 + $0xc4] sm:$0xf]
  %v200 = vld [vmem:[%s0 + $0xc8] sm:$0xf]
  %v201 = vld [vmem:[%s0 + $0xcc] sm:$0xf]
  %v202 = vld [vmem:[%s0 + $0xd0] sm:$0xf]
  %v203 = vld [vmem:[%s0 + $0xd4] sm:$0xf]
  %v204 = vld [vmem:[%s0 + $0xd8] sm:$0xf]
  %v205 = vld [vmem:[%s0 + $0xdc] sm:$0xf]
  %v206 = vld [vmem:[%s0 + $0xe0] sm:$0xf]
  %v207 = vld [vmem:[%s0 + $0xe4] sm:$0xf]
  %v208 = vld [vmem:[%s0 + $0xe8] sm:$0xf]
  %v209 = vld [vmem:[%s0 + $0xec] sm:$0xf]
  %v210 = vld [vmem:[%s0 + $0xf0] sm:$0xf]
  %v211 = vld [vmem:[%s0 + $0xf4] sm:$0xf]
  %v212 = vld [vmem:[%s0 + $0xf8] sm:$0xf]
  %v213 = vld [vmem:[%s0 + $0xfc] sm:$0xf]
  %v214 = vld [vmem:[%s1] sm:$0xf]
  %v215 = vld [vmem:[%s1 + $0x4] sm:$0xf]
  %v216 = vld [vmem:[%s1 + $0x8] sm:$0xf]
  %v217 = vld [vmem:[%s1 + $0xc] sm:$0xf]
  %v218 = vld [vmem:[%s1 + $0x10] sm:$0xf]
  %v219 = vld [vmem:[%s1 + $0x14] sm:$0xf]
  %v220 = vld [vmem:[%s1 + $0x18] sm:$0xf]
  %v221 = vld [vmem:[%s1 + $0x1c] sm:$0xf]
  %v222 = vld [vmem:[%s1 + $0x20] sm:$0xf]
  %v223 = vld [vmem:[%s1 + $0x24] sm:$0xf]
  %v224 = vld [vmem:[%s1 + $0x28] sm:$0xf]
  %v225 = vld [vmem:[%s1 + $0x2c] sm:$0xf]
  %v226 = vld [vmem:[%s1 + $0x30] sm:$0xf]
  %v227 = vld [vmem:[%s1 + $0x34] sm:$0xf]
  %v228 = vld [vmem:[%s1 + $0x38] sm:$0xf]
  %v229 = vld [vmem:[%s1 + $0x3c] sm:$0xf]
  %v294 = vunpack.c.l.b16 %v150
  %v295 = vunpack.c.l.b16 %v151
  %v296 = vunpack.c.l.b16 %v152
  %v297 = vunpack.c.l.b16 %v153
  %v298 = vunpack.c.l.b16 %v154
  %v299 = vunpack.c.l.b16 %v155
  %v300 = vunpack.c.l.b16 %v156
  %v301 = vunpack.c.l.b16 %v157
  %v302 = vunpack.c.l.b16 %v158
  %v303 = vunpack.c.l.b16 %v159
  %v304 = vunpack.c.l.b16 %v160
  %v305 = vunpack.c.l.b16 %v161
  %v306 = vunpack.c.l.b16 %v162
  %v307 = vunpack.c.l.b16 %v163
  %v308 = vunpack.c.l.b16 %v164
  %v309 = vunpack.c.l.b16 %v165
  %v310 = vunpack.c.l.b16 %v166
  %v311 = vunpack.c.l.b16 %v167
  %v312 = vunpack.c.l.b16 %v168
  %v313 = vunpack.c.l.b16 %v169
  %v314 = vunpack.c.l.b16 %v170
  %v315 = vunpack.c.l.b16 %v171
  %v316 = vunpack.c.l.b16 %v172
  %v317 = vunpack.c.l.b16 %v173
  %v318 = vunpack.c.l.b16 %v174
  %v319 = vunpack.c.l.b16 %v175
  %v320 = vunpack.c.l.b16 %v176
  %v321 = vunpack.c.l.b16 %v177
  %v322 = vunpack.c.l.b16 %v178
  %v323 = vunpack.c.l.b16 %v179
  %v324 = vunpack.c.l.b16 %v180
  %v325 = vunpack.c.l.b16 %v181
  %v326 = vunpack.c.l.b16 %v182
  %v327 = vunpack.c.l.b16 %v183
  %v328 = vunpack.c.l.b16 %v184
  %v329 = vunpack.c.l.b16 %v185
  %v330 = vunpack.c.l.b16 %v186
  %v331 = vunpack.c.l.b16 %v187
  %v332 = vunpack.c.l.b16 %v188
  %v333 = vunpack.c.l.b16 %v189
  %v334 = vunpack.c.l.b16 %v190
  %v335 = vunpack.c.l.b16 %v191
  %v336 = vunpack.c.l.b16 %v192
  %v337 = vunpack.c.l.b16 %v193
  %v338 = vunpack.c.l.b16 %v194
  %v339 = vunpack.c.l.b16 %v195
  %v340 = vunpack.c.l.b16 %v196
  %v341 = vunpack.c.l.b16 %v197
  %v342 = vunpack.c.l.b16 %v198
  %v343 = vunpack.c.l.b16 %v199
  %v344 = vunpack.c.l.b16 %v200
  %v345 = vunpack.c.l.b16 %v201
  %v346 = vunpack.c.l.b16 %v202
  %v347 = vunpack.c.l.b16 %v203
  %v348 = vunpack.c.l.b16 %v204
  %v349 = vunpack.c.l.b16 %v205
  %v350 = vunpack.c.l.b16 %v206
  %v351 = vunpack.c.l.b16 %v207
  %v352 = vunpack.c.l.b16 %v208
  %v353 = vunpack.c.l.b16 %v209
  %v354 = vunpack.c.l.b16 %v210
  %v355 = vunpack.c.l.b16 %v211
  %v356 = vunpack.c.l.b16 %v212
  %v357 = vunpack.c.l.b16 %v213
  %v358 = vpack.c.b16 %v295, %v294
  %v359 = vpack.c.b16 %v297, %v296
  %v360 = vpack.c.b16 %v299, %v298
  %v361 = vpack.c.b16 %v301, %v300
  %v362 = vpack.c.b16 %v303, %v302
  %v363 = vpack.c.b16 %v305, %v304
  %v364 = vpack.c.b16 %v307, %v306
  %v365 = vpack.c.b16 %v309, %v308
  %v366 = vpack.c.b16 %v311, %v310
  %v367 = vpack.c.b16 %v313, %v312
  %v368 = vpack.c.b16 %v315, %v314
  %v369 = vpack.c.b16 %v317, %v316
  %v370 = vpack.c.b16 %v319, %v318
  %v371 = vpack.c.b16 %v321, %v320
  %v372 = vpack.c.b16 %v323, %v322
  %v373 = vpack.c.b16 %v325, %v324
  %v374 = vpack.c.b16 %v327, %v326
  %v375 = vpack.c.b16 %v329, %v328
  %v376 = vpack.c.b16 %v331, %v330
  %v377 = vpack.c.b16 %v333, %v332
  %v378 = vpack.c.b16 %v335, %v334
  %v379 = vpack.c.b16 %v337, %v336
  %v380 = vpack.c.b16 %v339, %v338
  %v381 = vpack.c.b16 %v341, %v340
  %v382 = vpack.c.b16 %v343, %v342
  %v383 = vpack.c.b16 %v345, %v344
  %v384 = vpack.c.b16 %v347, %v346
  %v385 = vpack.c.b16 %v349, %v348
  %v386 = vpack.c.b16 %v351, %v350
  %v387 = vpack.c.b16 %v353, %v352
  %v388 = vpack.c.b16 %v355, %v354
  %v389 = vpack.c.b16 %v357, %v356
  %v438 = vunpack.c.l.b16 %v214
  %v439 = vunpack.c.l.b16 %v215
  %v440 = vunpack.c.l.b16 %v216
  %v441 = vunpack.c.l.b16 %v217
  %v442 = vunpack.c.l.b16 %v218
  %v443 = vunpack.c.l.b16 %v219
  %v444 = vunpack.c.l.b16 %v220
  %v445 = vunpack.c.l.b16 %v221
  %v446 = vunpack.c.l.b16 %v222
  %v447 = vunpack.c.l.b16 %v223
  %v448 = vunpack.c.l.b16 %v224
  %v449 = vunpack.c.l.b16 %v225
  %v450 = vunpack.c.l.b16 %v226
  %v451 = vunpack.c.l.b16 %v227
  %v452 = vunpack.c.l.b16 %v228
  %v453 = vunpack.c.l.b16 %v229
  %v454 = vpack.c.b16 %v439, %v438
  %v455 = vpack.c.b16 %v441, %v440
  %v456 = vpack.c.b16 %v443, %v442
  %v457 = vpack.c.b16 %v445, %v444
  %v458 = vpack.c.b16 %v447, %v446
  %v459 = vpack.c.b16 %v449, %v448
  %v460 = vpack.c.b16 %v451, %v450
  %v461 = vpack.c.b16 %v453, %v452
  %470 = vmatprep.subr.bf16.mxu0 0
  %471 = vmatpush1.bf16.msra.mxu0 %v461
  %472 = vmatprep.subr.bf16.mxu0 0
  %473 = vmatpush1.bf16.msra.mxu0 %v460
  %474 = vmatprep.subr.bf16.mxu0 0
  %475 = vmatpush1.bf16.msra.mxu0 %v459
  %476 = vmatprep.subr.bf16.mxu0 0
  %477 = vmatpush1.bf16.msra.mxu0 %v458
  %478 = vmatprep.subr.bf16.mxu0 0
  %479 = vmatpush1.bf16.msra.mxu0 %v457
  %480 = vmatprep.subr.bf16.mxu0 0
  %481 = vmatpush1.bf16.msra.mxu0 %v456
  %482 = vmatprep.subr.bf16.mxu0 0
  %483 = vmatpush1.bf16.msra.mxu0 %v455
  %484 = vmatprep.subr.bf16.mxu0 0
  %485 = vmatpush1.bf16.msra.mxu0 %v454
  %486 = vmatprep.subr.bf16.mxu0 0
  %487 = vmatpush2.bf16.msra.mxu0 0
  %488 = vmatprep.subr.bf16.mxu0 0
  %489 = vmatpush2.bf16.msra.mxu0 0
  %490 = vmatprep.subr.bf16.mxu0 0
  %491 = vmatpush2.bf16.msra.mxu0 0
  %492 = vmatprep.subr.bf16.mxu0 0
  %493 = vmatpush2.bf16.msra.mxu0 0
  %494 = vmatprep.subr.bf16.mxu0 0
  %495 = vmatpush2.bf16.msra.mxu0 0
  %496 = vmatprep.subr.bf16.mxu0 0
  %497 = vmatpush2.bf16.msra.mxu0 0
  %498 = vmatprep.subr.bf16.mxu0 0
  %499 = vmatpush2.bf16.msra.mxu0 0
  %500 = vmatprep.subr.bf16.mxu0 0
  %501 = vmatpush2.bf16.msra.mxu0 0
  %502 = vmatprep.mubr.bf16.mxu0 0
  %503 = vmatmul.mubr.bf16.gmra.mxu0 %v358
  %v504 = vpop.f32.mrf.mxu0
  %v505 = vadd.f32 0.0, %v504
  %v506 = vpop.f32.mrf.mxu0
  %v507 = vpop.f32.mrf.mxu0
  %v508 = vadd.f32 0.0, %v507
  %v509 = vpop.f32.mrf.mxu0
  %510 = vmatprep.mubr.bf16.mxu0 0
  %511 = vmatmul.mubr.bf16.gmra.mxu0 %v359
  %v512 = vpop.f32.mrf.mxu0
  %v513 = vadd.f32 0.0, %v512
  %v514 = vpop.f32.mrf.mxu0
  %v515 = vpop.f32.mrf.mxu0
  %v516 = vadd.f32 0.0, %v515
  %v517 = vpop.f32.mrf.mxu0
  %518 = vmatprep.mubr.bf16.mxu0 0
  %519 = vmatmul.mubr.bf16.gmra.mxu0 %v360
  %v520 = vpop.f32.mrf.mxu0
  %v521 = vadd.f32 0.0, %v520
  %v522 = vpop.f32.mrf.mxu0
  %v523 = vpop.f32.mrf.mxu0
  %v524 = vadd.f32 0.0, %v523
  %v525 = vpop.f32.mrf.mxu0
  %526 = vmatprep.mubr.bf16.mxu0 0
  %527 = vmatmul.mubr.bf16.gmra.mxu0 %v361
  %v528 = vpop.f32.mrf.mxu0
  %v529 = vadd.f32 0.0, %v528
  %v530 = vpop.f32.mrf.mxu0
  %v531 = vpop.f32.mrf.mxu0
  %v532 = vadd.f32 0.0, %v531
  %v533 = vpop.f32.mrf.mxu0
  %534 = vmatprep.mubr.bf16.mxu0 0
  %535 = vmatmul.mubr.bf16.gmra.mxu0 %v362
  %v536 = vpop.f32.mrf.mxu0
  %v537 = vadd.f32 0.0, %v536
  %v538 = vpop.f32.mrf.mxu0
  %v539 = vpop.f32.mrf.mxu0
  %v540 = vadd.f32 0.0, %v539
  %v541 = vpop.f32.mrf.mxu0
  %542 = vmatprep.mubr.bf16.mxu0 0
  %543 = vmatmul.mubr.bf16.gmra.mxu0 %v363
  %v544 = vpop.f32.mrf.mxu0
  %v545 = vadd.f32 0.0, %v544
  %v546 = vpop.f32.mrf.mxu0
  %v547 = vpop.f32.mrf.mxu0
  %v548 = vadd.f32 0.0, %v547
  %v549 = vpop.f32.mrf.mxu0
  %550 = vmatprep.mubr.bf16.mxu0 0
  %551 = vmatmul.mubr.bf16.gmra.mxu0 %v364
  %v552 = vpop.f32.mrf.mxu0
  %v553 = vadd.f32 0.0, %v552
  %v554 = vpop.f32.mrf.mxu0
  %v555 = vpop.f32.mrf.mxu0
  %v556 = vadd.f32 0.0, %v555
  %v557 = vpop.f32.mrf.mxu0
  %558 = vmatprep.mubr.bf16.mxu0 0
  %559 = vmatmul.mubr.bf16.gmra.mxu0 %v365
  %v560 = vpop.f32.mrf.mxu0
  %v561 = vadd.f32 0.0, %v560
  %v562 = vpop.f32.mrf.mxu0
  %v563 = vpop.f32.mrf.mxu0
  %v564 = vadd.f32 0.0, %v563
  %v565 = vpop.f32.mrf.mxu0
  %566 = vmatprep.mubr.bf16.mxu0 0
  %567 = vmatmul.mubr.bf16.gmra.mxu0 %v366
  %v568 = vpop.f32.mrf.mxu0
  %v569 = vadd.f32 0.0, %v568
  %v570 = vpop.f32.mrf.mxu0
  %v571 = vpop.f32.mrf.mxu0
  %v572 = vadd.f32 0.0, %v571
  %v573 = vpop.f32.mrf.mxu0
  %574 = vmatprep.mubr.bf16.mxu0 0
  %575 = vmatmul.mubr.bf16.gmra.mxu0 %v367
  %v576 = vpop.f32.mrf.mxu0
  %v577 = vadd.f32 0.0, %v576
  %v578 = vpop.f32.mrf.mxu0
  %v579 = vpop.f32.mrf.mxu0
  %v580 = vadd.f32 0.0, %v579
  %v581 = vpop.f32.mrf.mxu0
  %582 = vmatprep.mubr.bf16.mxu0 0
  %583 = vmatmul.mubr.bf16.gmra.mxu0 %v368
  %v584 = vpop.f32.mrf.mxu0
  %v585 = vadd.f32 0.0, %v584
  %v586 = vpop.f32.mrf.mxu0
  %v587 = vpop.f32.mrf.mxu0
  %v588 = vadd.f32 0.0, %v587
  %v589 = vpop.f32.mrf.mxu0
  %590 = vmatprep.mubr.bf16.mxu0 0
  %591 = vmatmul.mubr.bf16.gmra.mxu0 %v369
  %v592 = vpop.f32.mrf.mxu0
  %v593 = vadd.f32 0.0, %v592
  %v594 = vpop.f32.mrf.mxu0
  %v595 = vpop.f32.mrf.mxu0
  %v596 = vadd.f32 0.0, %v595
  %v597 = vpop.f32.mrf.mxu0
  %598 = vmatprep.mubr.bf16.mxu0 0
  %599 = vmatmul.mubr.bf16.gmra.mxu0 %v370
  %v600 = vpop.f32.mrf.mxu0
  %v601 = vadd.f32 0.0, %v600
  %v602 = vpop.f32.mrf.mxu0
  %v603 = vpop.f32.mrf.mxu0
  %v604 = vadd.f32 0.0, %v603
  %v605 = vpop.f32.mrf.mxu0
  %606 = vmatprep.mubr.bf16.mxu0 0
  %607 = vmatmul.mubr.bf16.gmra.mxu0 %v371
  %v608 = vpop.f32.mrf.mxu0
  %v609 = vadd.f32 0.0, %v608
  %v610 = vpop.f32.mrf.mxu0
  %v611 = vpop.f32.mrf.mxu0
  %v612 = vadd.f32 0.0, %v611
  %v613 = vpop.f32.mrf.mxu0
  %614 = vmatprep.mubr.bf16.mxu0 0
  %615 = vmatmul.mubr.bf16.gmra.mxu0 %v372
  %v616 = vpop.f32.mrf.mxu0
  %v617 = vadd.f32 0.0, %v616
  %v618 = vpop.f32.mrf.mxu0
  %v619 = vpop.f32.mrf.mxu0
  %v620 = vadd.f32 0.0, %v619
  %v621 = vpop.f32.mrf.mxu0
  %622 = vmatprep.mubr.bf16.mxu0 0
  %623 = vmatmul.mubr.bf16.gmra.mxu0 %v373
  %v624 = vpop.f32.mrf.mxu0
  %v625 = vadd.f32 0.0, %v624
  %v626 = vpop.f32.mrf.mxu0
  %v627 = vpop.f32.mrf.mxu0
  %v628 = vadd.f32 0.0, %v627
  %v629 = vpop.f32.mrf.mxu0
  %630 = vmatprep.mubr.bf16.mxu0 0
  %631 = vmatmul.mubr.bf16.gmra.mxu0 %v374
  %v632 = vpop.f32.mrf.mxu0
  %v633 = vadd.f32 0.0, %v632
  %v634 = vpop.f32.mrf.mxu0
  %v635 = vpop.f32.mrf.mxu0
  %v636 = vadd.f32 0.0, %v635
  %v637 = vpop.f32.mrf.mxu0
  %638 = vmatprep.mubr.bf16.mxu0 0
  %639 = vmatmul.mubr.bf16.gmra.mxu0 %v375
  %v640 = vpop.f32.mrf.mxu0
  %v641 = vadd.f32 0.0, %v640
  %v642 = vpop.f32.mrf.mxu0
  %v643 = vpop.f32.mrf.mxu0
  %v644 = vadd.f32 0.0, %v643
  %v645 = vpop.f32.mrf.mxu0
  %646 = vmatprep.mubr.bf16.mxu0 0
  %647 = vmatmul.mubr.bf16.gmra.mxu0 %v376
  %v648 = vpop.f32.mrf.mxu0
  %v649 = vadd.f32 0.0, %v648
  %v650 = vpop.f32.mrf.mxu0
  %v651 = vpop.f32.mrf.mxu0
  %v652 = vadd.f32 0.0, %v651
  %v653 = vpop.f32.mrf.mxu0
  %654 = vmatprep.mubr.bf16.mxu0 0
  %655 = vmatmul.mubr.bf16.gmra.mxu0 %v377
  %v656 = vpop.f32.mrf.mxu0
  %v657 = vadd.f32 0.0, %v656
  %v658 = vpop.f32.mrf.mxu0
  %v659 = vpop.f32.mrf.mxu0
  %v660 = vadd.f32 0.0, %v659
  %v661 = vpop.f32.mrf.mxu0
  %662 = vmatprep.mubr.bf16.mxu0 0
  %663 = vmatmul.mubr.bf16.gmra.mxu0 %v378
  %v664 = vpop.f32.mrf.mxu0
  %v665 = vadd.f32 0.0, %v664
  %v666 = vpop.f32.mrf.mxu0
  %v667 = vpop.f32.mrf.mxu0
  %v668 = vadd.f32 0.0, %v667
  %v669 = vpop.f32.mrf.mxu0
  %670 = vmatprep.mubr.bf16.mxu0 0
  %671 = vmatmul.mubr.bf16.gmra.mxu0 %v379
  %v672 = vpop.f32.mrf.mxu0
  %v673 = vadd.f32 0.0, %v672
  %v674 = vpop.f32.mrf.mxu0
  %v675 = vpop.f32.mrf.mxu0
  %v676 = vadd.f32 0.0, %v675
  %v677 = vpop.f32.mrf.mxu0
  %678 = vmatprep.mubr.bf16.mxu0 0
  %679 = vmatmul.mubr.bf16.gmra.mxu0 %v380
  %v680 = vpop.f32.mrf.mxu0
  %v681 = vadd.f32 0.0, %v680
  %v682 = vpop.f32.mrf.mxu0
  %v683 = vpop.f32.mrf.mxu0
  %v684 = vadd.f32 0.0, %v683
  %v685 = vpop.f32.mrf.mxu0
  %686 = vmatprep.mubr.bf16.mxu0 0
  %687 = vmatmul.mubr.bf16.gmra.mxu0 %v381
  %v688 = vpop.f32.mrf.mxu0
  %v689 = vadd.f32 0.0, %v688
  %v690 = vpop.f32.mrf.mxu0
  %v691 = vpop.f32.mrf.mxu0
  %v692 = vadd.f32 0.0, %v691
  %v693 = vpop.f32.mrf.mxu0
  %694 = vmatprep.mubr.bf16.mxu0 0
  %695 = vmatmul.mubr.bf16.gmra.mxu0 %v382
  %v696 = vpop.f32.mrf.mxu0
  %v697 = vadd.f32 0.0, %v696
  %v698 = vpop.f32.mrf.mxu0
  %v699 = vpop.f32.mrf.mxu0
  %v700 = vadd.f32 0.0, %v699
  %v701 = vpop.f32.mrf.mxu0
  %702 = vmatprep.mubr.bf16.mxu0 0
  %703 = vmatmul.mubr.bf16.gmra.mxu0 %v383
  %v704 = vpop.f32.mrf.mxu0
  %v705 = vadd.f32 0.0, %v704
  %v706 = vpop.f32.mrf.mxu0
  %v707 = vpop.f32.mrf.mxu0
  %v708 = vadd.f32 0.0, %v707
  %v709 = vpop.f32.mrf.mxu0
  %710 = vmatprep.mubr.bf16.mxu0 0
  %711 = vmatmul.mubr.bf16.gmra.mxu0 %v384
  %v712 = vpop.f32.mrf.mxu0
  %v713 = vadd.f32 0.0, %v712
  %v714 = vpop.f32.mrf.mxu0
  %v715 = vpop.f32.mrf.mxu0
  %v716 = vadd.f32 0.0, %v715
  %v717 = vpop.f32.mrf.mxu0
  %718 = vmatprep.mubr.bf16.mxu0 0
  %719 = vmatmul.mubr.bf16.gmra.mxu0 %v385
  %v720 = vpop.f32.mrf.mxu0
  %v721 = vadd.f32 0.0, %v720
  %v722 = vpop.f32.mrf.mxu0
  %v723 = vpop.f32.mrf.mxu0
  %v724 = vadd.f32 0.0, %v723
  %v725 = vpop.f32.mrf.mxu0
  %726 = vmatprep.mubr.bf16.mxu0 0
  %727 = vmatmul.mubr.bf16.gmra.mxu0 %v386
  %v728 = vpop.f32.mrf.mxu0
  %v729 = vadd.f32 0.0, %v728
  %v730 = vpop.f32.mrf.mxu0
  %v731 = vpop.f32.mrf.mxu0
  %v732 = vadd.f32 0.0, %v731
  %v733 = vpop.f32.mrf.mxu0
  %734 = vmatprep.mubr.bf16.mxu0 0
  %735 = vmatmul.mubr.bf16.gmra.mxu0 %v387
  %v736 = vpop.f32.mrf.mxu0
  %v737 = vadd.f32 0.0, %v736
  %v738 = vpop.f32.mrf.mxu0
  %v739 = vpop.f32.mrf.mxu0
  %v740 = vadd.f32 0.0, %v739
  %v741 = vpop.f32.mrf.mxu0
  %742 = vmatprep.mubr.bf16.mxu0 0
  %743 = vmatmul.mubr.bf16.gmra.mxu0 %v388
  %v744 = vpop.f32.mrf.mxu0
  %v745 = vadd.f32 0.0, %v744
  %v746 = vpop.f32.mrf.mxu0
  %v747 = vpop.f32.mrf.mxu0
  %v748 = vadd.f32 0.0, %v747
  %v749 = vpop.f32.mrf.mxu0
  %750 = vmatprep.mubr.bf16.mxu0 0
  %751 = vmatmul.mubr.bf16.gmra.mxu0 %v389
  %v752 = vpop.f32.mrf.mxu0
  %v753 = vadd.f32 0.0, %v752
  %v754 = vpop.f32.mrf.mxu0
  %v755 = vpop.f32.mrf.mxu0
  %v756 = vadd.f32 0.0, %v755
  %v757 = vpop.f32.mrf.mxu0
  %758 = vdwg.mxu0
  %v759 = vadd.f32 %v86, %v505
  %v760 = vadd.f32 %v87, %v508
  %v761 = vadd.f32 %v88, %v513
  %v762 = vadd.f32 %v89, %v516
  %v763 = vadd.f32 %v90, %v521
  %v764 = vadd.f32 %v91, %v524
  %v765 = vadd.f32 %v92, %v529
  %v766 = vadd.f32 %v93, %v532
  %v767 = vadd.f32 %v94, %v537
  %v768 = vadd.f32 %v95, %v540
  %v769 = vadd.f32 %v96, %v545
  %v770 = vadd.f32 %v97, %v548
  %v771 = vadd.f32 %v98, %v553
  %v772 = vadd.f32 %v99, %v556
  %v773 = vadd.f32 %v100, %v561
  %v774 = vadd.f32 %v101, %v564
  %v775 = vadd.f32 %v102, %v569
  %v776 = vadd.f32 %v103, %v572
  %v777 = vadd.f32 %v104, %v577
  %v778 = vadd.f32 %v105, %v580
  %v779 = vadd.f32 %v106, %v585
  %v780 = vadd.f32 %v107, %v588
  %v781 = vadd.f32 %v108, %v593
  %v782 = vadd.f32 %v109, %v596
  %v783 = vadd.f32 %v110, %v601
  %v784 = vadd.f32 %v111, %v604
  %v785 = vadd.f32 %v112, %v609
  %v786 = vadd.f32 %v113, %v612
  %v787 = vadd.f32 %v114, %v617
  %v788 = vadd.f32 %v115, %v620
  %v789 = vadd.f32 %v116, %v625
  %v790 = vadd.f32 %v117, %v628
  %v791 = vadd.f32 %v118, %v633
  %v792 = vadd.f32 %v119, %v636
  %v793 = vadd.f32 %v120, %v641
  %v794 = vadd.f32 %v121, %v644
  %v795 = vadd.f32 %v122, %v649
  %v796 = vadd.f32 %v123, %v652
  %v797 = vadd.f32 %v124, %v657
  %v798 = vadd.f32 %v125, %v660
  %v799 = vadd.f32 %v126, %v665
  %v800 = vadd.f32 %v127, %v668
  %v801 = vadd.f32 %v128, %v673
  %v802 = vadd.f32 %v129, %v676
  %v803 = vadd.f32 %v130, %v681
  %v804 = vadd.f32 %v131, %v684
  %v805 = vadd.f32 %v132, %v689
  %v806 = vadd.f32 %v133, %v692
  %v807 = vadd.f32 %v134, %v697
  %v808 = vadd.f32 %v135, %v700
  %v809 = vadd.f32 %v136, %v705
  %v810 = vadd.f32 %v137, %v708
  %v811 = vadd.f32 %v138, %v713
  %v812 = vadd.f32 %v139, %v716
  %v813 = vadd.f32 %v140, %v721
  %v814 = vadd.f32 %v141, %v724
  %v815 = vadd.f32 %v142, %v729
  %v816 = vadd.f32 %v143, %v732
  %v817 = vadd.f32 %v144, %v737
  %v818 = vadd.f32 %v145, %v740
  %v819 = vadd.f32 %v146, %v745
  %v820 = vadd.f32 %v147, %v748
  %v821 = vadd.f32 %v148, %v753
  %v822 = vadd.f32 %v149, %v756
  %823 = vst [vmem:[#allocation2] sm:$0xff] %v759
  %824 = vst [vmem:[#allocation2 + $0x8] sm:$0xff] %v760
  %825 = vst [vmem:[#allocation2 + $0x10] sm:$0xff] %v761
  %826 = vst [vmem:[#allocation2 + $0x18] sm:$0xff] %v762
  %827 = vst [vmem:[#allocation2 + $0x20] sm:$0xff] %v763
  %828 = vst [vmem:[#allocation2 + $0x28] sm:$0xff] %v764
  %829 = vst [vmem:[#allocation2 + $0x30] sm:$0xff] %v765
  %830 = vst [vmem:[#allocation2 + $0x38] sm:$0xff] %v766
  %831 = vst [vmem:[#allocation2 + $0x40] sm:$0xff] %v767
  %832 = vst [vmem:[#allocation2 + $0x48] sm:$0xff] %v768
  %833 = vst [vmem:[#allocation2 + $0x50] sm:$0xff] %v769
  %834 = vst [vmem:[#allocation2 + $0x58] sm:$0xff] %v770
  %835 = vst [vmem:[#allocation2 + $0x60] sm:$0xff] %v771
  %836 = vst [vmem:[#allocation2 + $0x68] sm:$0xff] %v772
  %837 = vst [vmem:[#allocation2 + $0x70] sm:$0xff] %v773
  %838 = vst [vmem:[#allocation2 + $0x78] sm:$0xff] %v774
  %839 = vst [vmem:[#allocation2 + $0x80] sm:$0xff] %v775
  %840 = vst [vmem:[#allocation2 + $0x88] sm:$0xff] %v776
  %841 = vst [vmem:[#allocation2 + $0x90] sm:$0xff] %v777
  %842 = vst [vmem:[#allocation2 + $0x98] sm:$0xff] %v778
  %843 = vst [vmem:[#allocation2 + $0xa0] sm:$0xff] %v779
  %844 = vst [vmem:[#allocation2 + $0xa8] sm:$0xff] %v780
  %845 = vst [vmem:[#allocation2 + $0xb0] sm:$0xff] %v781
  %846 = vst [vmem:[#allocation2 + $0xb8] sm:$0xff] %v782
  %847 = vst [vmem:[#allocation2 + $0xc0] sm:$0xff] %v783
  %848 = vst [vmem:[#allocation2 + $0xc8] sm:$0xff] %v784
  %849 = vst [vmem:[#allocation2 + $0xd0] sm:$0xff] %v785
  %850 = vst [vmem:[#allocation2 + $0xd8] sm:$0xff] %v786
  %851 = vst [vmem:[#allocation2 + $0xe0] sm:$0xff] %v787
  %852 = vst [vmem:[#allocation2 + $0xe8] sm:$0xff] %v788
  %853 = vst [vmem:[#allocation2 + $0xf0] sm:$0xff] %v789
  %854 = vst [vmem:[#allocation2 + $0xf8] sm:$0xff] %v790
  %855 = vst [vmem:[#allocation2 + $0x100] sm:$0xff] %v791
  %856 = vst [vmem:[#allocation2 + $0x108] sm:$0xff] %v792
  %857 = vst [vmem:[#allocation2 + $0x110] sm:$0xff] %v793
  %858 = vst [vmem:[#allocation2 + $0x118] sm:$0xff] %v794
  %859 = vst [vmem:[#allocation2 + $0x120] sm:$0xff] %v795
  %860 = vst [vmem:[#allocation2 + $0x128] sm:$0xff] %v796
  %861 = vst [vmem:[#allocation2 + $0x130] sm:$0xff] %v797
  %862 = vst [vmem:[#allocation2 + $0x138] sm:$0xff] %v798
  %863 = vst [vmem:[#allocation2 + $0x140] sm:$0xff] %v799
  %864 = vst [vmem:[#allocation2 + $0x148] sm:$0xff] %v800
  %865 = vst [vmem:[#allocation2 + $0x150] sm:$0xff] %v801
  %866 = vst [vmem:[#allocation2 + $0x158] sm:$0xff] %v802
  %867 = vst [vmem:[#allocation2 + $0x160] sm:$0xff] %v803
  %868 = vst [vmem:[#allocation2 + $0x168] sm:$0xff] %v804
  %869 = vst [vmem:[#allocation2 + $0x170] sm:$0xff] %v805
  %870 = vst [vmem:[#allocation2 + $0x178] sm:$0xff] %v806
  %871 = vst [vmem:[#allocation2 + $0x180] sm:$0xff] %v807
  %872 = vst [vmem:[#allocation2 + $0x188] sm:$0xff] %v808
  %873 = vst [vmem:[#allocation2 + $0x190] sm:$0xff] %v809
  %874 = vst [vmem:[#allocation2 + $0x198] sm:$0xff] %v810
  %875 = vst [vmem:[#allocation2 + $0x1a0] sm:$0xff] %v811
  %876 = vst [vmem:[#allocation2 + $0x1a8] sm:$0xff] %v812
  %877 = vst [vmem:[#allocation2 + $0x1b0] sm:$0xff] %v813
  %878 = vst [vmem:[#allocation2 + $0x1b8] sm:$0xff] %v814
  %879 = vst [vmem:[#allocation2 + $0x1c0] sm:$0xff] %v815
  %880 = vst [vmem:[#allocation2 + $0x1c8] sm:$0xff] %v816
  %881 = vst [vmem:[#allocation2 + $0x1d0] sm:$0xff] %v817
  %882 = vst [vmem:[#allocation2 + $0x1d8] sm:$0xff] %v818
  %883 = vst [vmem:[#allocation2 + $0x1e0] sm:$0xff] %v819
  %884 = vst [vmem:[#allocation2 + $0x1e8] sm:$0xff] %v820
  %885 = vst [vmem:[#allocation2 + $0x1f0] sm:$0xff] %v821
  %886 = vst [vmem:[#allocation2 + $0x1f8] sm:$0xff] %v822
  // Predicated region
  $region22: #{basic_block_forward.2} parent=0 // pred_check
    %p887 = pneg %p18
  $region23: #{basic_block_forward.2} parent=0 // pred_check_branch
    %889 = sbr.rel (%p887) target = $region25
  $region24: #{basic_block_forward.2} parent=0 // pred_region
    %v890 = vld [vmem:[#allocation2] sm:$0xff]
    %v891 = vld [vmem:[#allocation2 + $0x8] sm:$0xff]
    %v892 = vld [vmem:[#allocation2 + $0x10] sm:$0xff]
    %v893 = vld [vmem:[#allocation2 + $0x18] sm:$0xff]
    %v894 = vld [vmem:[#allocation2 + $0x20] sm:$0xff]
    %v895 = vld [vmem:[#allocation2 + $0x28] sm:$0xff]
    %v896 = vld [vmem:[#allocation2 + $0x30] sm:$0xff]
    %v897 = vld [vmem:[#allocation2 + $0x38] sm:$0xff]
    %v898 = vld [vmem:[#allocation2 + $0x40] sm:$0xff]
    %v899 = vld [vmem:[#allocation2 + $0x48] sm:$0xff]
    %v900 = vld [vmem:[#allocation2 + $0x50] sm:$0xff]
    %v901 = vld [vmem:[#allocation2 + $0x58] sm:$0xff]
    %v902 = vld [vmem:[#allocation2 + $0x60] sm:$0xff]
    %v903 = vld [vmem:[#allocation2 + $0x68] sm:$0xff]
    %v904 = vld [vmem:[#allocation2 + $0x70] sm:$0xff]
    %v905 = vld [vmem:[#allocation2 + $0x78] sm:$0xff]
    %v906 = vld [vmem:[#allocation2 + $0x80] sm:$0xff]
    %v907 = vld [vmem:[#allocation2 + $0x88] sm:$0xff]
    %v908 = vld [vmem:[#allocation2 + $0x90] sm:$0xff]
    %v909 = vld [vmem:[#allocation2 + $0x98] sm:$0xff]
    %v910 = vld [vmem:[#allocation2 + $0xa0] sm:$0xff]
    %v911 = vld [vmem:[#allocation2 + $0xa8] sm:$0xff]
    %v912 = vld [vmem:[#allocation2 + $0xb0] sm:$0xff]
    %v913 = vld [vmem:[#allocation2 + $0xb8] sm:$0xff]
    %v914 = vld [vmem:[#allocation2 + $0xc0] sm:$0xff]
    %v915 = vld [vmem:[#allocation2 + $0xc8] sm:$0xff]
    %v916 = vld [vmem:[#allocation2 + $0xd0] sm:$0xff]
    %v917 = vld [vmem:[#allocation2 + $0xd8] sm:$0xff]
    %v918 = vld [vmem:[#allocation2 + $0xe0] sm:$0xff]
    %v919 = vld [vmem:[#allocation2 + $0xe8] sm:$0xff]
    %v920 = vld [vmem:[#allocation2 + $0xf0] sm:$0xff]
    %v921 = vld [vmem:[#allocation2 + $0xf8] sm:$0xff]
    %v922 = vld [vmem:[#allocation2 + $0x100] sm:$0xff]
    %v923 = vld [vmem:[#allocation2 + $0x108] sm:$0xff]
    %v924 = vld [vmem:[#allocation2 + $0x110] sm:$0xff]
    %v925 = vld [vmem:[#allocation2 + $0x118] sm:$0xff]
    %v926 = vld [vmem:[#allocation2 + $0x120] sm:$0xff]
    %v927 = vld [vmem:[#allocation2 + $0x128] sm:$0xff]
    %v928 = vld [vmem:[#allocation2 + $0x130] sm:$0xff]
    %v929 = vld [vmem:[#allocation2 + $0x138] sm:$0xff]
    %v930 = vld [vmem:[#allocation2 + $0x140] sm:$0xff]
    %v931 = vld [vmem:[#allocation2 + $0x148] sm:$0xff]
    %v932 = vld [vmem:[#allocation2 + $0x150] sm:$0xff]
    %v933 = vld [vmem:[#allocation2 + $0x158] sm:$0xff]
    %v934 = vld [vmem:[#allocation2 + $0x160] sm:$0xff]
    %v935 = vld [vmem:[#allocation2 + $0x168] sm:$0xff]
    %v936 = vld [vmem:[#allocation2 + $0x170] sm:$0xff]
    %v937 = vld [vmem:[#allocation2 + $0x178] sm:$0xff]
    %v938 = vld [vmem:[#allocation2 + $0x180] sm:$0xff]
    %v939 = vld [vmem:[#allocation2 + $0x188] sm:$0xff]
    %v940 = vld [vmem:[#allocation2 + $0x190] sm:$0xff]
    %v941 = vld [vmem:[#allocation2 + $0x198] sm:$0xff]
    %v942 = vld [vmem:[#allocation2 + $0x1a0] sm:$0xff]
    %v943 = vld [vmem:[#allocation2 + $0x1a8] sm:$0xff]
    %v944 = vld [vmem:[#allocation2 + $0x1b0] sm:$0xff]
    %v945 = vld [vmem:[#allocation2 + $0x1b8] sm:$0xff]
    %v946 = vld [vmem:[#allocation2 + $0x1c0] sm:$0xff]
    %v947 = vld [vmem:[#allocation2 + $0x1c8] sm:$0xff]
    %v948 = vld [vmem:[#allocation2 + $0x1d0] sm:$0xff]
    %v949 = vld [vmem:[#allocation2 + $0x1d8] sm:$0xff]
    %v950 = vld [vmem:[#allocation2 + $0x1e0] sm:$0xff]
    %v951 = vld [vmem:[#allocation2 + $0x1e8] sm:$0xff]
    %v952 = vld [vmem:[#allocation2 + $0x1f0] sm:$0xff]
    %v953 = vld [vmem:[#allocation2 + $0x1f8] sm:$0xff]
    %v954 = vld [vmem:[%s2] sm:$0x1]
    %v956 = vlaneseq
    %v957 = vshrl.u32 %v956, 7
    %v958 = vsub.s32 0, %v957
    %v959 = vrot.slane %v954, %v958
    %v961 = vmul.f32 %v890, %v959
    %v962 = vmul.f32 %v891, %v959
    %v963 = vmul.f32 %v892, %v959
    %v964 = vmul.f32 %v893, %v959
    %v965 = vmul.f32 %v894, %v959
    %v966 = vmul.f32 %v895, %v959
    %v967 = vmul.f32 %v896, %v959
    %v968 = vmul.f32 %v897, %v959
    %v969 = vmul.f32 %v898, %v959
    %v970 = vmul.f32 %v899, %v959
    %v971 = vmul.f32 %v900, %v959
    %v972 = vmul.f32 %v901, %v959
    %v973 = vmul.f32 %v902, %v959
    %v974 = vmul.f32 %v903, %v959
    %v975 = vmul.f32 %v904, %v959
    %v976 = vmul.f32 %v905, %v959
    %v977 = vmul.f32 %v906, %v959
    %v978 = vmul.f32 %v907, %v959
    %v979 = vmul.f32 %v908, %v959
    %v980 = vmul.f32 %v909, %v959
    %v981 = vmul.f32 %v910, %v959
    %v982 = vmul.f32 %v911, %v959
    %v983 = vmul.f32 %v912, %v959
    %v984 = vmul.f32 %v913, %v959
    %v985 = vmul.f32 %v914, %v959
    %v986 = vmul.f32 %v915, %v959
    %v987 = vmul.f32 %v916, %v959
    %v988 = vmul.f32 %v917, %v959
    %v989 = vmul.f32 %v918, %v959
    %v990 = vmul.f32 %v919, %v959
    %v991 = vmul.f32 %v920, %v959
    %v992 = vmul.f32 %v921, %v959
    %v993 = vmul.f32 %v922, %v959
    %v994 = vmul.f32 %v923, %v959
    %v995 = vmul.f32 %v924, %v959
    %v996 = vmul.f32 %v925, %v959
    %v997 = vmul.f32 %v926, %v959
    %v998 = vmul.f32 %v927, %v959
    %v999 = vmul.f32 %v928, %v959
    %v1000 = vmul.f32 %v929, %v959
    %v1001 = vmul.f32 %v930, %v959
    %v1002 = vmul.f32 %v931, %v959
    %v1003 = vmul.f32 %v932, %v959
    %v1004 = vmul.f32 %v933, %v959
    %v1005 = vmul.f32 %v934, %v959
    %v1006 = vmul.f32 %v935, %v959
    %v1007 = vmul.f32 %v936, %v959
    %v1008 = vmul.f32 %v937, %v959
    %v1009 = vmul.f32 %v938, %v959
    %v1010 = vmul.f32 %v939, %v959
    %v1011 = vmul.f32 %v940, %v959
    %v1012 = vmul.f32 %v941, %v959
    %v1013 = vmul.f32 %v942, %v959
    %v1014 = vmul.f32 %v943, %v959
    %v1015 = vmul.f32 %v944, %v959
    %v1016 = vmul.f32 %v945, %v959
    %v1017 = vmul.f32 %v946, %v959
    %v1018 = vmul.f32 %v947, %v959
    %v1019 = vmul.f32 %v948, %v959
    %v1020 = vmul.f32 %v949, %v959
    %v1021 = vmul.f32 %v950, %v959
    %v1022 = vmul.f32 %v951, %v959
    %v1023 = vmul.f32 %v952, %v959
    %v1024 = vmul.f32 %v953, %v959
    %v1025 = vld [vmem:[%s3] sm:$0x1]
    %v1027 = vlaneseq
    %v1028 = vshrl.u32 %v1027, 7
    %v1029 = vsub.s32 0, %v1028
    %v1030 = vrot.slane %v1025, %v1029
    %v1032 = vadd.f32 %v961, %v1030
    %v1033 = vadd.f32 %v962, %v1030
    %v1034 = vadd.f32 %v963, %v1030
    %v1035 = vadd.f32 %v964, %v1030
    %v1036 = vadd.f32 %v965, %v1030
    %v1037 = vadd.f32 %v966, %v1030
    %v1038 = vadd.f32 %v967, %v1030
    %v1039 = vadd.f32 %v968, %v1030
    %v1040 = vadd.f32 %v969, %v1030
    %v1041 = vadd.f32 %v970, %v1030
    %v1042 = vadd.f32 %v971, %v1030
    %v1043 = vadd.f32 %v972, %v1030
    %v1044 = vadd.f32 %v973, %v1030
    %v1045 = vadd.f32 %v974, %v1030
    %v1046 = vadd.f32 %v975, %v1030
    %v1047 = vadd.f32 %v976, %v1030
    %v1048 = vadd.f32 %v977, %v1030
    %v1049 = vadd.f32 %v978, %v1030
    %v1050 = vadd.f32 %v979, %v1030
    %v1051 = vadd.f32 %v980, %v1030
    %v1052 = vadd.f32 %v981, %v1030
    %v1053 = vadd.f32 %v982, %v1030
    %v1054 = vadd.f32 %v983, %v1030
    %v1055 = vadd.f32 %v984, %v1030
    %v1056 = vadd.f32 %v985, %v1030
    %v1057 = vadd.f32 %v986, %v1030
    %v1058 = vadd.f32 %v987, %v1030
    %v1059 = vadd.f32 %v988, %v1030
    %v1060 = vadd.f32 %v989, %v1030
    %v1061 = vadd.f32 %v990, %v1030
    %v1062 = vadd.f32 %v991, %v1030
    %v1063 = vadd.f32 %v992, %v1030
    %v1064 = vadd.f32 %v993, %v1030
    %v1065 = vadd.f32 %v994, %v1030
    %v1066 = vadd.f32 %v995, %v1030
    %v1067 = vadd.f32 %v996, %v1030
    %v1068 = vadd.f32 %v997, %v1030
    %v1069 = vadd.f32 %v998, %v1030
    %v1070 = vadd.f32 %v999, %v1030
    %v1071 = vadd.f32 %v1000, %v1030
    %v1072 = vadd.f32 %v1001, %v1030
    %v1073 = vadd.f32 %v1002, %v1030
    %v1074 = vadd.f32 %v1003, %v1030
    %v1075 = vadd.f32 %v1004, %v1030
    %v1076 = vadd.f32 %v1005, %v1030
    %v1077 = vadd.f32 %v1006, %v1030
    %v1078 = vadd.f32 %v1007, %v1030
    %v1079 = vadd.f32 %v1008, %v1030
    %v1080 = vadd.f32 %v1009, %v1030
    %v1081 = vadd.f32 %v1010, %v1030
    %v1082 = vadd.f32 %v1011, %v1030
    %v1083 = vadd.f32 %v1012, %v1030
    %v1084 = vadd.f32 %v1013, %v1030
    %v1085 = vadd.f32 %v1014, %v1030
    %v1086 = vadd.f32 %v1015, %v1030
    %v1087 = vadd.f32 %v1016, %v1030
    %v1088 = vadd.f32 %v1017, %v1030
    %v1089 = vadd.f32 %v1018, %v1030
    %v1090 = vadd.f32 %v1019, %v1030
    %v1091 = vadd.f32 %v1020, %v1030
    %v1092 = vadd.f32 %v1021, %v1030
    %v1093 = vadd.f32 %v1022, %v1030
    %v1094 = vadd.f32 %v1023, %v1030
    %v1095 = vadd.f32 %v1024, %v1030
    %v1096 = vmax.f32 %v1032, 0.0
    %v1097 = vmax.f32 %v1033, 0.0
    %v1098 = vmax.f32 %v1034, 0.0
    %v1099 = vmax.f32 %v1035, 0.0
    %v1100 = vmax.f32 %v1036, 0.0
    %v1101 = vmax.f32 %v1037, 0.0
    %v1102 = vmax.f32 %v1038, 0.0
    %v1103 = vmax.f32 %v1039, 0.0
    %v1104 = vmax.f32 %v1040, 0.0
    %v1105 = vmax.f32 %v1041, 0.0
    %v1106 = vmax.f32 %v1042, 0.0
    %v1107 = vmax.f32 %v1043, 0.0
    %v1108 = vmax.f32 %v1044, 0.0
    %v1109 = vmax.f32 %v1045, 0.0
    %v1110 = vmax.f32 %v1046, 0.0
    %v1111 = vmax.f32 %v1047, 0.0
    %v1112 = vmax.f32 %v1048, 0.0
    %v1113 = vmax.f32 %v1049, 0.0
    %v1114 = vmax.f32 %v1050, 0.0
    %v1115 = vmax.f32 %v1051, 0.0
    %v1116 = vmax.f32 %v1052, 0.0
    %v1117 = vmax.f32 %v1053, 0.0
    %v1118 = vmax.f32 %v1054, 0.0
    %v1119 = vmax.f32 %v1055, 0.0
    %v1120 = vmax.f32 %v1056, 0.0
    %v1121 = vmax.f32 %v1057, 0.0
    %v1122 = vmax.f32 %v1058, 0.0
    %v1123 = vmax.f32 %v1059, 0.0
    %v1124 = vmax.f32 %v1060, 0.0
    %v1125 = vmax.f32 %v1061, 0.0
    %v1126 = vmax.f32 %v1062, 0.0
    %v1127 = vmax.f32 %v1063, 0.0
    %v1128 = vmax.f32 %v1064, 0.0
    %v1129 = vmax.f32 %v1065, 0.0
    %v1130 = vmax.f32 %v1066, 0.0
    %v1131 = vmax.f32 %v1067, 0.0
    %v1132 = vmax.f32 %v1068, 0.0
    %v1133 = vmax.f32 %v1069, 0.0
    %v1134 = vmax.f32 %v1070, 0.0
    %v1135 = vmax.f32 %v1071, 0.0
    %v1136 = vmax.f32 %v1072, 0.0
    %v1137 = vmax.f32 %v1073, 0.0
    %v1138 = vmax.f32 %v1074, 0.0
    %v1139 = vmax.f32 %v1075, 0.0
    %v1140 = vmax.f32 %v1076, 0.0
    %v1141 = vmax.f32 %v1077, 0.0
    %v1142 = vmax.f32 %v1078, 0.0
    %v1143 = vmax.f32 %v1079, 0.0
    %v1144 = vmax.f32 %v1080, 0.0
    %v1145 = vmax.f32 %v1081, 0.0
    %v1146 = vmax.f32 %v1082, 0.0
    %v1147 = vmax.f32 %v1083, 0.0
    %v1148 = vmax.f32 %v1084, 0.0
    %v1149 = vmax.f32 %v1085, 0.0
    %v1150 = vmax.f32 %v1086, 0.0
    %v1151 = vmax.f32 %v1087, 0.0
    %v1152 = vmax.f32 %v1088, 0.0
    %v1153 = vmax.f32 %v1089, 0.0
    %v1154 = vmax.f32 %v1090, 0.0
    %v1155 = vmax.f32 %v1091, 0.0
    %v1156 = vmax.f32 %v1092, 0.0
    %v1157 = vmax.f32 %v1093, 0.0
    %v1158 = vmax.f32 %v1094, 0.0
    %v1159 = vmax.f32 %v1095, 0.0
    %v1160 = vpack.c.bf16 %v1097, %v1096
    %v1161 = vpack.c.bf16 %v1099, %v1098
    %v1162 = vpack.c.bf16 %v1101, %v1100
    %v1163 = vpack.c.bf16 %v1103, %v1102
    %v1164 = vpack.c.bf16 %v1105, %v1104
    %v1165 = vpack.c.bf16 %v1107, %v1106
    %v1166 = vpack.c.bf16 %v1109, %v1108
    %v1167 = vpack.c.bf16 %v1111, %v1110
    %v1168 = vpack.c.bf16 %v1113, %v1112
    %v1169 = vpack.c.bf16 %v1115, %v1114
    %v1170 = vpack.c.bf16 %v1117, %v1116
    %v1171 = vpack.c.bf16 %v1119, %v1118
    %v1172 = vpack.c.bf16 %v1121, %v1120
    %v1173 = vpack.c.bf16 %v1123, %v1122
    %v1174 = vpack.c.bf16 %v1125, %v1124
    %v1175 = vpack.c.bf16 %v1127, %v1126
    %v1176 = vpack.c.bf16 %v1129, %v1128
    %v1177 = vpack.c.bf16 %v1131, %v1130
    %v1178 = vpack.c.bf16 %v1133, %v1132
    %v1179 = vpack.c.bf16 %v1135, %v1134
    %v1180 = vpack.c.bf16 %v1137, %v1136
    %v1181 = vpack.c.bf16 %v1139, %v1138
    %v1182 = vpack.c.bf16 %v1141, %v1140
    %v1183 = vpack.c.bf16 %v1143, %v1142
    %v1184 = vpack.c.bf16 %v1145, %v1144
    %v1185 = vpack.c.bf16 %v1147, %v1146
    %v1186 = vpack.c.bf16 %v1149, %v1148
    %v1187 = vpack.c.bf16 %v1151, %v1150
    %v1188 = vpack.c.bf16 %v1153, %v1152
    %v1189 = vpack.c.bf16 %v1155, %v1154
    %v1190 = vpack.c.bf16 %v1157, %v1156
    %v1191 = vpack.c.bf16 %v1159, %v1158
    %v1224 = vunpack.c.l.b16 %v1160
    %v1225 = vunpack.c.h.b16 %v1160
    %v1226 = vunpack.c.l.b16 %v1161
    %v1227 = vunpack.c.h.b16 %v1161
    %v1228 = vunpack.c.l.b16 %v1162
    %v1229 = vunpack.c.h.b16 %v1162
    %v1230 = vunpack.c.l.b16 %v1163
    %v1231 = vunpack.c.h.b16 %v1163
    %v1232 = vunpack.c.l.b16 %v1164
    %v1233 = vunpack.c.h.b16 %v1164
    %v1234 = vunpack.c.l.b16 %v1165
    %v1235 = vunpack.c.h.b16 %v1165
    %v1236 = vunpack.c.l.b16 %v1166
    %v1237 = vunpack.c.h.b16 %v1166
    %v1238 = vunpack.c.l.b16 %v1167
    %v1239 = vunpack.c.h.b16 %v1167
    %v1240 = vunpack.c.l.b16 %v1168
    %v1241 = vunpack.c.h.b16 %v1168
    %v1242 = vunpack.c.l.b16 %v1169
    %v1243 = vunpack.c.h.b16 %v1169
    %v1244 = vunpack.c.l.b16 %v1170
    %v1245 = vunpack.c.h.b16 %v1170
    %v1246 = vunpack.c.l.b16 %v1171
    %v1247 = vunpack.c.h.b16 %v1171
    %v1248 = vunpack.c.l.b16 %v1172
    %v1249 = vunpack.c.h.b16 %v1172
    %v1250 = vunpack.c.l.b16 %v1173
    %v1251 = vunpack.c.h.b16 %v1173
    %v1252 = vunpack.c.l.b16 %v1174
    %v1253 = vunpack.c.h.b16 %v1174
    %v1254 = vunpack.c.l.b16 %v1175
    %v1255 = vunpack.c.h.b16 %v1175
    %v1256 = vunpack.c.l.b16 %v1176
    %v1257 = vunpack.c.h.b16 %v1176
    %v1258 = vunpack.c.l.b16 %v1177
    %v1259 = vunpack.c.h.b16 %v1177
    %v1260 = vunpack.c.l.b16 %v1178
    %v1261 = vunpack.c.h.b16 %v1178
    %v1262 = vunpack.c.l.b16 %v1179
    %v1263 = vunpack.c.h.b16 %v1179
    %v1264 = vunpack.c.l.b16 %v1180
    %v1265 = vunpack.c.h.b16 %v1180
    %v1266 = vunpack.c.l.b16 %v1181
    %v1267 = vunpack.c.h.b16 %v1181
    %v1268 = vunpack.c.l.b16 %v1182
    %v1269 = vunpack.c.h.b16 %v1182
    %v1270 = vunpack.c.l.b16 %v1183
    %v1271 = vunpack.c.h.b16 %v1183
    %v1272 = vunpack.c.l.b16 %v1184
    %v1273 = vunpack.c.h.b16 %v1184
    %v1274 = vunpack.c.l.b16 %v1185
    %v1275 = vunpack.c.h.b16 %v1185
    %v1276 = vunpack.c.l.b16 %v1186
    %v1277 = vunpack.c.h.b16 %v1186
    %v1278 = vunpack.c.l.b16 %v1187
    %v1279 = vunpack.c.h.b16 %v1187
    %v1280 = vunpack.c.l.b16 %v1188
    %v1281 = vunpack.c.h.b16 %v1188
    %v1282 = vunpack.c.l.b16 %v1189
    %v1283 = vunpack.c.h.b16 %v1189
    %v1284 = vunpack.c.l.b16 %v1190
    %v1285 = vunpack.c.h.b16 %v1190
    %v1286 = vunpack.c.l.b16 %v1191
    %v1287 = vunpack.c.h.b16 %v1191
    %v1288 = vpack.c.b16 %v1224, %v1224
    %v1289 = vpack.c.b16 %v1225, %v1225
    %v1290 = vpack.c.b16 %v1226, %v1226
    %v1291 = vpack.c.b16 %v1227, %v1227
    %v1292 = vpack.c.b16 %v1228, %v1228
    %v1293 = vpack.c.b16 %v1229, %v1229
    %v1294 = vpack.c.b16 %v1230, %v1230
    %v1295 = vpack.c.b16 %v1231, %v1231
    %v1296 = vpack.c.b16 %v1232, %v1232
    %v1297 = vpack.c.b16 %v1233, %v1233
    %v1298 = vpack.c.b16 %v1234, %v1234
    %v1299 = vpack.c.b16 %v1235, %v1235
    %v1300 = vpack.c.b16 %v1236, %v1236
    %v1301 = vpack.c.b16 %v1237, %v1237
    %v1302 = vpack.c.b16 %v1238, %v1238
    %v1303 = vpack.c.b16 %v1239, %v1239
    %v1304 = vpack.c.b16 %v1240, %v1240
    %v1305 = vpack.c.b16 %v1241, %v1241
    %v1306 = vpack.c.b16 %v1242, %v1242
    %v1307 = vpack.c.b16 %v1243, %v1243
    %v1308 = vpack.c.b16 %v1244, %v1244
    %v1309 = vpack.c.b16 %v1245, %v1245
    %v1310 = vpack.c.b16 %v1246, %v1246
    %v1311 = vpack.c.b16 %v1247, %v1247
    %v1312 = vpack.c.b16 %v1248, %v1248
    %v1313 = vpack.c.b16 %v1249, %v1249
    %v1314 = vpack.c.b16 %v1250, %v1250
    %v1315 = vpack.c.b16 %v1251, %v1251
    %v1316 = vpack.c.b16 %v1252, %v1252
    %v1317 = vpack.c.b16 %v1253, %v1253
    %v1318 = vpack.c.b16 %v1254, %v1254
    %v1319 = vpack.c.b16 %v1255, %v1255
    %v1320 = vpack.c.b16 %v1256, %v1256
    %v1321 = vpack.c.b16 %v1257, %v1257
    %v1322 = vpack.c.b16 %v1258, %v1258
    %v1323 = vpack.c.b16 %v1259, %v1259
    %v1324 = vpack.c.b16 %v1260, %v1260
    %v1325 = vpack.c.b16 %v1261, %v1261
    %v1326 = vpack.c.b16 %v1262, %v1262
    %v1327 = vpack.c.b16 %v1263, %v1263
    %v1328 = vpack.c.b16 %v1264, %v1264
    %v1329 = vpack.c.b16 %v1265, %v1265
    %v1330 = vpack.c.b16 %v1266, %v1266
    %v1331 = vpack.c.b16 %v1267, %v1267
    %v1332 = vpack.c.b16 %v1268, %v1268
    %v1333 = vpack.c.b16 %v1269, %v1269
    %v1334 = vpack.c.b16 %v1270, %v1270
    %v1335 = vpack.c.b16 %v1271, %v1271
    %v1336 = vpack.c.b16 %v1272, %v1272
    %v1337 = vpack.c.b16 %v1273, %v1273
    %v1338 = vpack.c.b16 %v1274, %v1274
    %v1339 = vpack.c.b16 %v1275, %v1275
    %v1340 = vpack.c.b16 %v1276, %v1276
    %v1341 = vpack.c.b16 %v1277, %v1277
    %v1342 = vpack.c.b16 %v1278, %v1278
    %v1343 = vpack.c.b16 %v1279, %v1279
    %v1344 = vpack.c.b16 %v1280, %v1280
    %v1345 = vpack.c.b16 %v1281, %v1281
    %v1346 = vpack.c.b16 %v1282, %v1282
    %v1347 = vpack.c.b16 %v1283, %v1283
    %v1348 = vpack.c.b16 %v1284, %v1284
    %v1349 = vpack.c.b16 %v1285, %v1285
    %v1350 = vpack.c.b16 %v1286, %v1286
    %v1351 = vpack.c.b16 %v1287, %v1287
    %1416 = vst [vmem:[%s4] sm:$0xf] %v1288
    %1417 = vst [vmem:[%s4 + $0x4] sm:$0xf] %v1289
    %1418 = vst [vmem:[%s4 + $0x8] sm:$0xf] %v1290
    %1419 = vst [vmem:[%s4 + $0xc] sm:$0xf] %v1291
    %1420 = vst [vmem:[%s4 + $0x10] sm:$0xf] %v1292
    %1421 = vst [vmem:[%s4 + $0x14] sm:$0xf] %v1293
    %1422 = vst [vmem:[%s4 + $0x18] sm:$0xf] %v1294
    %1423 = vst [vmem:[%s4 + $0x1c] sm:$0xf] %v1295
    %1424 = vst [vmem:[%s4 + $0x20] sm:$0xf] %v1296
    %1425 = vst [vmem:[%s4 + $0x24] sm:$0xf] %v1297
    %1426 = vst [vmem:[%s4 + $0x28] sm:$0xf] %v1298
    %1427 = vst [vmem:[%s4 + $0x2c] sm:$0xf] %v1299
    %1428 = vst [vmem:[%s4 + $0x30] sm:$0xf] %v1300
    %1429 = vst [vmem:[%s4 + $0x34] sm:$0xf] %v1301
    %1430 = vst [vmem:[%s4 + $0x38] sm:$0xf] %v1302
    %1431 = vst [vmem:[%s4 + $0x3c] sm:$0xf] %v1303
    %1432 = vst [vmem:[%s4 + $0x40] sm:$0xf] %v1304
    %1433 = vst [vmem:[%s4 + $0x44] sm:$0xf] %v1305
    %1434 = vst [vmem:[%s4 + $0x48] sm:$0xf] %v1306
    %1435 = vst [vmem:[%s4 + $0x4c] sm:$0xf] %v1307
    %1436 = vst [vmem:[%s4 + $0x50] sm:$0xf] %v1308
    %1437 = vst [vmem:[%s4 + $0x54] sm:$0xf] %v1309
    %1438 = vst [vmem:[%s4 + $0x58] sm:$0xf] %v1310
    %1439 = vst [vmem:[%s4 + $0x5c] sm:$0xf] %v1311
    %1440 = vst [vmem:[%s4 + $0x60] sm:$0xf] %v1312
    %1441 = vst [vmem:[%s4 + $0x64] sm:$0xf] %v1313
    %1442 = vst [vmem:[%s4 + $0x68] sm:$0xf] %v1314
    %1443 = vst [vmem:[%s4 + $0x6c] sm:$0xf] %v1315
    %1444 = vst [vmem:[%s4 + $0x70] sm:$0xf] %v1316
    %1445 = vst [vmem:[%s4 + $0x74] sm:$0xf] %v1317
    %1446 = vst [vmem:[%s4 + $0x78] sm:$0xf] %v1318
    %1447 = vst [vmem:[%s4 + $0x7c] sm:$0xf] %v1319
    %1448 = vst [vmem:[%s4 + $0x80] sm:$0xf] %v1320
    %1449 = vst [vmem:[%s4 + $0x84] sm:$0xf] %v1321
    %1450 = vst [vmem:[%s4 + $0x88] sm:$0xf] %v1322
    %1451 = vst [vmem:[%s4 + $0x8c] sm:$0xf] %v1323
    %1452 = vst [vmem:[%s4 + $0x90] sm:$0xf] %v1324
    %1453 = vst [vmem:[%s4 + $0x94] sm:$0xf] %v1325
    %1454 = vst [vmem:[%s4 + $0x98] sm:$0xf] %v1326
    %1455 = vst [vmem:[%s4 + $0x9c] sm:$0xf] %v1327
    %1456 = vst [vmem:[%s4 + $0xa0] sm:$0xf] %v1328
    %1457 = vst [vmem:[%s4 + $0xa4] sm:$0xf] %v1329
    %1458 = vst [vmem:[%s4 + $0xa8] sm:$0xf] %v1330
    %1459 = vst [vmem:[%s4 + $0xac] sm:$0xf] %v1331
    %1460 = vst [vmem:[%s4 + $0xb0] sm:$0xf] %v1332
    %1461 = vst [vmem:[%s4 + $0xb4] sm:$0xf] %v1333
    %1462 = vst [vmem:[%s4 + $0xb8] sm:$0xf] %v1334
    %1463 = vst [vmem:[%s4 + $0xbc] sm:$0xf] %v1335
    %1464 = vst [vmem:[%s4 + $0xc0] sm:$0xf] %v1336
    %1465 = vst [vmem:[%s4 + $0xc4] sm:$0xf] %v1337
    %1466 = vst [vmem:[%s4 + $0xc8] sm:$0xf] %v1338
    %1467 = vst [vmem:[%s4 + $0xcc] sm:$0xf] %v1339
    %1468 = vst [vmem:[%s4 + $0xd0] sm:$0xf] %v1340
    %1469 = vst [vmem:[%s4 + $0xd4] sm:$0xf] %v1341
    %1470 = vst [vmem:[%s4 + $0xd8] sm:$0xf] %v1342
    %1471 = vst [vmem:[%s4 + $0xdc] sm:$0xf] %v1343
    %1472 = vst [vmem:[%s4 + $0xe0] sm:$0xf] %v1344
    %1473 = vst [vmem:[%s4 + $0xe4] sm:$0xf] %v1345
    %1474 = vst [vmem:[%s4 + $0xe8] sm:$0xf] %v1346
    %1475 = vst [vmem:[%s4 + $0xec] sm:$0xf] %v1347
    %1476 = vst [vmem:[%s4 + $0xf0] sm:$0xf] %v1348
    %1477 = vst [vmem:[%s4 + $0xf4] sm:$0xf] %v1349
    %1478 = vst [vmem:[%s4 + $0xf8] sm:$0xf] %v1350
    %1479 = vst [vmem:[%s4 + $0xfc] sm:$0xf] %v1351
  $region25: #{basic_block_forward.2} parent=0 // pred_fallthru
    _
  // Predicated region
  $region26: #{basic_block_forward.2} parent=0 // pred_check
    _
  $region27: #{basic_block_forward.2} parent=0 // pred_check_branch
    %1481 = sbr.rel (0) target = $region29
  $region28: #{basic_block_forward.2} parent=0 // pred_region
    _
  $region29: #{basic_block_forward.2} parent=0 // pred_fallthru
    _
  // Predicated region
  $region30: #{basic_block_forward.2} parent=0 // pred_check
    _
  $region31: #{basic_block_forward.2} parent=0 // pred_check_branch
    %1483 = sbr.rel (0) target = $region33
  $region32: #{basic_block_forward.2} parent=0 // pred_region
    _
  $region33: #{basic_block_forward.2} parent=0 // pred_fallthru
    _

// kernel: basic_block_forward.3
$region0: #{basic_block_forward.3}
  #allocation0 [shape = 'u32[]', space=smem, size = 0x4, offset = 0x4, fixed_abs, tag = 'smem constant byte address 0x4 - core index']
  #allocation1 [shape = 'u32[144,128]{1,0:T(1,128)}', space=vmem, size = 0x12000, scoped, tag = 'internal scratch']
  #allocation2 [shape = 'f32[512,128]{1,0:T(8,128)}', space=vmem, size = 0x40000, scoped, tag = 'scratch operand']
  %s0 = inlined_call_operand.vmem [shape: bf16[512,128], index: 0, kind: input, shape index: {}]
  %s1 = inlined_call_operand.vmem [shape: bf16[128,128], index: 1, kind: input, shape index: {}]
  %s2 = inlined_call_operand.vmem [shape: f32[1,128], index: 2, kind: input, shape index: {}]
  %s3 = inlined_call_operand.vmem [shape: f32[1,128], index: 3, kind: input, shape index: {}]
  %s4 = inlined_call_operand.vmem [shape: f32[512,128], index: 4, kind: input, shape index: {}]
  %s5 = inlined_call_operand.vmem [shape: f32[512,128], index: 5, kind: output, shape index: {}]
  %s6 = sld [smem:[#allocation0]]
  $region38: #{basic_block_forward.3} parent=0
    _
  %s8 = ssub.s32 1, %s6
  %s9 = scalar_select 0, %s8, %s6
  // Predicated region
  $region2: #{basic_block_forward.3} parent=0 // pred_check
    _
  $region3: #{basic_block_forward.3} parent=0 // pred_check_branch
    %11 = sbr.rel (0) target = $region5
  $region4: #{basic_block_forward.3} parent=0 // pred_region
    _
  $region5: #{basic_block_forward.3} parent=0 // pred_fallthru
    _
  // Predicated region
  $region6: #{basic_block_forward.3} parent=0 // pred_check
    _
  $region7: #{basic_block_forward.3} parent=0 // pred_check_branch
    %13 = sbr.rel (0) target = $region9
  $region8: #{basic_block_forward.3} parent=0 // pred_region
    _
  $region9: #{basic_block_forward.3} parent=0 // pred_fallthru
    _
  // Predicated region
  $region10: #{basic_block_forward.3} parent=0 // pred_check
    _
  $region11: #{basic_block_forward.3} parent=0 // pred_check_branch
    %15 = sbr.rel (0) target = $region13
  $region12: #{basic_block_forward.3} parent=0 // pred_region
    _
  $region13: #{basic_block_forward.3} parent=0 // pred_fallthru
    _
  // Predicated region
  $region14: #{basic_block_forward.3} parent=0 // pred_check
    _
  $region15: #{basic_block_forward.3} parent=0 // pred_check_branch
    %17 = sbr.rel (0) target = $region17
  $region16: #{basic_block_forward.3} parent=0 // pred_region
    _
  $region17: #{basic_block_forward.3} parent=0 // pred_fallthru
    _
  // Predicated region
  $region18: #{basic_block_forward.3} parent=0 // pred_check
    _
  $region19: #{basic_block_forward.3} parent=0 // pred_check_branch
    %19 = sbr.rel (0) target = $region21
  $region20: #{basic_block_forward.3} parent=0 // pred_region
    _
  $region21: #{basic_block_forward.3} parent=0 // pred_fallthru
    _
  %p21 = scmp.eq.s32.totalorder 0, 0
  // Predicated region
  $region22: #{basic_block_forward.3} parent=0 // pred_check
    %p22 = pneg %p21
  $region23: #{basic_block_forward.3} parent=0 // pred_check_branch
    %24 = sbr.rel (%p22) target = $region25
  $region24: #{basic_block_forward.3} parent=0 // pred_region
    %25 = vst [vmem:[#allocation2] sm:$0xff] 0.0
    %26 = vst [vmem:[#allocation2 + $0x8] sm:$0xff] 0.0
    %27 = vst [vmem:[#allocation2 + $0x10] sm:$0xff] 0.0
    %28 = vst [vmem:[#allocation2 + $0x18] sm:$0xff] 0.0
    %29 = vst [vmem:[#allocation2 + $0x20] sm:$0xff] 0.0
    %30 = vst [vmem:[#allocation2 + $0x28] sm:$0xff] 0.0
    %31 = vst [vmem:[#allocation2 + $0x30] sm:$0xff] 0.0
    %32 = vst [vmem:[#allocation2 + $0x38] sm:$0xff] 0.0
    %33 = vst [vmem:[#allocation2 + $0x40] sm:$0xff] 0.0
    %34 = vst [vmem:[#allocation2 + $0x48] sm:$0xff] 0.0
    %35 = vst [vmem:[#allocation2 + $0x50] sm:$0xff] 0.0
    %36 = vst [vmem:[#allocation2 + $0x58] sm:$0xff] 0.0
    %37 = vst [vmem:[#allocation2 + $0x60] sm:$0xff] 0.0
    %38 = vst [vmem:[#allocation2 + $0x68] sm:$0xff] 0.0
    %39 = vst [vmem:[#allocation2 + $0x70] sm:$0xff] 0.0
    %40 = vst [vmem:[#allocation2 + $0x78] sm:$0xff] 0.0
    %41 = vst [vmem:[#allocation2 + $0x80] sm:$0xff] 0.0
    %42 = vst [vmem:[#allocation2 + $0x88] sm:$0xff] 0.0
    %43 = vst [vmem:[#allocation2 + $0x90] sm:$0xff] 0.0
    %44 = vst [vmem:[#allocation2 + $0x98] sm:$0xff] 0.0
    %45 = vst [vmem:[#allocation2 + $0xa0] sm:$0xff] 0.0
    %46 = vst [vmem:[#allocation2 + $0xa8] sm:$0xff] 0.0
    %47 = vst [vmem:[#allocation2 + $0xb0] sm:$0xff] 0.0
    %48 = vst [vmem:[#allocation2 + $0xb8] sm:$0xff] 0.0
    %49 = vst [vmem:[#allocation2 + $0xc0] sm:$0xff] 0.0
    %50 = vst [vmem:[#allocation2 + $0xc8] sm:$0xff] 0.0
    %51 = vst [vmem:[#allocation2 + $0xd0] sm:$0xff] 0.0
    %52 = vst [vmem:[#allocation2 + $0xd8] sm:$0xff] 0.0
    %53 = vst [vmem:[#allocation2 + $0xe0] sm:$0xff] 0.0
    %54 = vst [vmem:[#allocation2 + $0xe8] sm:$0xff] 0.0
    %55 = vst [vmem:[#allocation2 + $0xf0] sm:$0xff] 0.0
    %56 = vst [vmem:[#allocation2 + $0xf8] sm:$0xff] 0.0
    %57 = vst [vmem:[#allocation2 + $0x100] sm:$0xff] 0.0
    %58 = vst [vmem:[#allocation2 + $0x108] sm:$0xff] 0.0
    %59 = vst [vmem:[#allocation2 + $0x110] sm:$0xff] 0.0
    %60 = vst [vmem:[#allocation2 + $0x118] sm:$0xff] 0.0
    %61 = vst [vmem:[#allocation2 + $0x120] sm:$0xff] 0.0
    %62 = vst [vmem:[#allocation2 + $0x128] sm:$0xff] 0.0
    %63 = vst [vmem:[#allocation2 + $0x130] sm:$0xff] 0.0
    %64 = vst [vmem:[#allocation2 + $0x138] sm:$0xff] 0.0
    %65 = vst [vmem:[#allocation2 + $0x140] sm:$0xff] 0.0
    %66 = vst [vmem:[#allocation2 + $0x148] sm:$0xff] 0.0
    %67 = vst [vmem:[#allocation2 + $0x150] sm:$0xff] 0.0
    %68 = vst [vmem:[#allocation2 + $0x158] sm:$0xff] 0.0
    %69 = vst [vmem:[#allocation2 + $0x160] sm:$0xff] 0.0
    %70 = vst [vmem:[#allocation2 + $0x168] sm:$0xff] 0.0
    %71 = vst [vmem:[#allocation2 + $0x170] sm:$0xff] 0.0
    %72 = vst [vmem:[#allocation2 + $0x178] sm:$0xff] 0.0
    %73 = vst [vmem:[#allocation2 + $0x180] sm:$0xff] 0.0
    %74 = vst [vmem:[#allocation2 + $0x188] sm:$0xff] 0.0
    %75 = vst [vmem:[#allocation2 + $0x190] sm:$0xff] 0.0
    %76 = vst [vmem:[#allocation2 + $0x198] sm:$0xff] 0.0
    %77 = vst [vmem:[#allocation2 + $0x1a0] sm:$0xff] 0.0
    %78 = vst [vmem:[#allocation2 + $0x1a8] sm:$0xff] 0.0
    %79 = vst [vmem:[#allocation2 + $0x1b0] sm:$0xff] 0.0
    %80 = vst [vmem:[#allocation2 + $0x1b8] sm:$0xff] 0.0
    %81 = vst [vmem:[#allocation2 + $0x1c0] sm:$0xff] 0.0
    %82 = vst [vmem:[#allocation2 + $0x1c8] sm:$0xff] 0.0
    %83 = vst [vmem:[#allocation2 + $0x1d0] sm:$0xff] 0.0
    %84 = vst [vmem:[#allocation2 + $0x1d8] sm:$0xff] 0.0
    %85 = vst [vmem:[#allocation2 + $0x1e0] sm:$0xff] 0.0
    %86 = vst [vmem:[#allocation2 + $0x1e8] sm:$0xff] 0.0
    %87 = vst [vmem:[#allocation2 + $0x1f0] sm:$0xff] 0.0
    %88 = vst [vmem:[#allocation2 + $0x1f8] sm:$0xff] 0.0
  $region25: #{basic_block_forward.3} parent=0 // pred_fallthru
    _
  %v89 = vld [vmem:[#allocation2] sm:$0xff]
  %v90 = vld [vmem:[#allocation2 + $0x8] sm:$0xff]
  %v91 = vld [vmem:[#allocation2 + $0x10] sm:$0xff]
  %v92 = vld [vmem:[#allocation2 + $0x18] sm:$0xff]
  %v93 = vld [vmem:[#allocation2 + $0x20] sm:$0xff]
  %v94 = vld [vmem:[#allocation2 + $0x28] sm:$0xff]
  %v95 = vld [vmem:[#allocation2 + $0x30] sm:$0xff]
  %v96 = vld [vmem:[#allocation2 + $0x38] sm:$0xff]
  %v97 = vld [vmem:[#allocation2 + $0x40] sm:$0xff]
  %v98 = vld [vmem:[#allocation2 + $0x48] sm:$0xff]
  %v99 = vld [vmem:[#allocation2 + $0x50] sm:$0xff]
  %v100 = vld [vmem:[#allocation2 + $0x58] sm:$0xff]
  %v101 = vld [vmem:[#allocation2 + $0x60] sm:$0xff]
  %v102 = vld [vmem:[#allocation2 + $0x68] sm:$0xff]
  %v103 = vld [vmem:[#allocation2 + $0x70] sm:$0xff]
  %v104 = vld [vmem:[#allocation2 + $0x78] sm:$0xff]
  %v105 = vld [vmem:[#allocation2 + $0x80] sm:$0xff]
  %v106 = vld [vmem:[#allocation2 + $0x88] sm:$0xff]
  %v107 = vld [vmem:[#allocation2 + $0x90] sm:$0xff]
  %v108 = vld [vmem:[#allocation2 + $0x98] sm:$0xff]
  %v109 = vld [vmem:[#allocation2 + $0xa0] sm:$0xff]
  %v110 = vld [vmem:[#allocation2 + $0xa8] sm:$0xff]
  %v111 = vld [vmem:[#allocation2 + $0xb0] sm:$0xff]
  %v112 = vld [vmem:[#allocation2 + $0xb8] sm:$0xff]
  %v113 = vld [vmem:[#allocation2 + $0xc0] sm:$0xff]
  %v114 = vld [vmem:[#allocation2 + $0xc8] sm:$0xff]
  %v115 = vld [vmem:[#allocation2 + $0xd0] sm:$0xff]
  %v116 = vld [vmem:[#allocation2 + $0xd8] sm:$0xff]
  %v117 = vld [vmem:[#allocation2 + $0xe0] sm:$0xff]
  %v118 = vld [vmem:[#allocation2 + $0xe8] sm:$0xff]
  %v119 = vld [vmem:[#allocation2 + $0xf0] sm:$0xff]
  %v120 = vld [vmem:[#allocation2 + $0xf8] sm:$0xff]
  %v121 = vld [vmem:[#allocation2 + $0x100] sm:$0xff]
  %v122 = vld [vmem:[#allocation2 + $0x108] sm:$0xff]
  %v123 = vld [vmem:[#allocation2 + $0x110] sm:$0xff]
  %v124 = vld [vmem:[#allocation2 + $0x118] sm:$0xff]
  %v125 = vld [vmem:[#allocation2 + $0x120] sm:$0xff]
  %v126 = vld [vmem:[#allocation2 + $0x128] sm:$0xff]
  %v127 = vld [vmem:[#allocation2 + $0x130] sm:$0xff]
  %v128 = vld [vmem:[#allocation2 + $0x138] sm:$0xff]
  %v129 = vld [vmem:[#allocation2 + $0x140] sm:$0xff]
  %v130 = vld [vmem:[#allocation2 + $0x148] sm:$0xff]
  %v131 = vld [vmem:[#allocation2 + $0x150] sm:$0xff]
  %v132 = vld [vmem:[#allocation2 + $0x158] sm:$0xff]
  %v133 = vld [vmem:[#allocation2 + $0x160] sm:$0xff]
  %v134 = vld [vmem:[#allocation2 + $0x168] sm:$0xff]
  %v135 = vld [vmem:[#allocation2 + $0x170] sm:$0xff]
  %v136 = vld [vmem:[#allocation2 + $0x178] sm:$0xff]
  %v137 = vld [vmem:[#allocation2 + $0x180] sm:$0xff]
  %v138 = vld [vmem:[#allocation2 + $0x188] sm:$0xff]
  %v139 = vld [vmem:[#allocation2 + $0x190] sm:$0xff]
  %v140 = vld [vmem:[#allocation2 + $0x198] sm:$0xff]
  %v141 = vld [vmem:[#allocation2 + $0x1a0] sm:$0xff]
  %v142 = vld [vmem:[#allocation2 + $0x1a8] sm:$0xff]
  %v143 = vld [vmem:[#allocation2 + $0x1b0] sm:$0xff]
  %v144 = vld [vmem:[#allocation2 + $0x1b8] sm:$0xff]
  %v145 = vld [vmem:[#allocation2 + $0x1c0] sm:$0xff]
  %v146 = vld [vmem:[#allocation2 + $0x1c8] sm:$0xff]
  %v147 = vld [vmem:[#allocation2 + $0x1d0] sm:$0xff]
  %v148 = vld [vmem:[#allocation2 + $0x1d8] sm:$0xff]
  %v149 = vld [vmem:[#allocation2 + $0x1e0] sm:$0xff]
  %v150 = vld [vmem:[#allocation2 + $0x1e8] sm:$0xff]
  %v151 = vld [vmem:[#allocation2 + $0x1f0] sm:$0xff]
  %v152 = vld [vmem:[#allocation2 + $0x1f8] sm:$0xff]
  %v153 = vld [vmem:[%s0] sm:$0xf]
  %v154 = vld [vmem:[%s0 + $0x4] sm:$0xf]
  %v155 = vld [vmem:[%s0 + $0x8] sm:$0xf]
  %v156 = vld [vmem:[%s0 + $0xc] sm:$0xf]
  %v157 = vld [vmem:[%s0 + $0x10] sm:$0xf]
  %v158 = vld [vmem:[%s0 + $0x14] sm:$0xf]
  %v159 = vld [vmem:[%s0 + $0x18] sm:$0xf]
  %v160 = vld [vmem:[%s0 + $0x1c] sm:$0xf]
  %v161 = vld [vmem:[%s0 + $0x20] sm:$0xf]
  %v162 = vld [vmem:[%s0 + $0x24] sm:$0xf]
  %v163 = vld [vmem:[%s0 + $0x28] sm:$0xf]
  %v164 = vld [vmem:[%s0 + $0x2c] sm:$0xf]
  %v165 = vld [vmem:[%s0 + $0x30] sm:$0xf]
  %v166 = vld [vmem:[%s0 + $0x34] sm:$0xf]
  %v167 = vld [vmem:[%s0 + $0x38] sm:$0xf]
  %v168 = vld [vmem:[%s0 + $0x3c] sm:$0xf]
  %v169 = vld [vmem:[%s0 + $0x40] sm:$0xf]
  %v170 = vld [vmem:[%s0 + $0x44] sm:$0xf]
  %v171 = vld [vmem:[%s0 + $0x48] sm:$0xf]
  %v172 = vld [vmem:[%s0 + $0x4c] sm:$0xf]
  %v173 = vld [vmem:[%s0 + $0x50] sm:$0xf]
  %v174 = vld [vmem:[%s0 + $0x54] sm:$0xf]
  %v175 = vld [vmem:[%s0 + $0x58] sm:$0xf]
  %v176 = vld [vmem:[%s0 + $0x5c] sm:$0xf]
  %v177 = vld [vmem:[%s0 + $0x60] sm:$0xf]
  %v178 = vld [vmem:[%s0 + $0x64] sm:$0xf]
  %v179 = vld [vmem:[%s0 + $0x68] sm:$0xf]
  %v180 = vld [vmem:[%s0 + $0x6c] sm:$0xf]
  %v181 = vld [vmem:[%s0 + $0x70] sm:$0xf]
  %v182 = vld [vmem:[%s0 + $0x74] sm:$0xf]
  %v183 = vld [vmem:[%s0 + $0x78] sm:$0xf]
  %v184 = vld [vmem:[%s0 + $0x7c] sm:$0xf]
  %v185 = vld [vmem:[%s0 + $0x80] sm:$0xf]
  %v186 = vld [vmem:[%s0 + $0x84] sm:$0xf]
  %v187 = vld [vmem:[%s0 + $0x88] sm:$0xf]
  %v188 = vld [vmem:[%s0 + $0x8c] sm:$0xf]
  %v189 = vld [vmem:[%s0 + $0x90] sm:$0xf]
  %v190 = vld [vmem:[%s0 + $0x94] sm:$0xf]
  %v191 = vld [vmem:[%s0 + $0x98] sm:$0xf]
  %v192 = vld [vmem:[%s0 + $0x9c] sm:$0xf]
  %v193 = vld [vmem:[%s0 + $0xa0] sm:$0xf]
  %v194 = vld [vmem:[%s0 + $0xa4] sm:$0xf]
  %v195 = vld [vmem:[%s0 + $0xa8] sm:$0xf]
  %v196 = vld [vmem:[%s0 + $0xac] sm:$0xf]
  %v197 = vld [vmem:[%s0 + $0xb0] sm:$0xf]
  %v198 = vld [vmem:[%s0 + $0xb4] sm:$0xf]
  %v199 = vld [vmem:[%s0 + $0xb8] sm:$0xf]
  %v200 = vld [vmem:[%s0 + $0xbc] sm:$0xf]
  %v201 = vld [vmem:[%s0 + $0xc0] sm:$0xf]
  %v202 = vld [vmem:[%s0 + $0xc4] sm:$0xf]
  %v203 = vld [vmem:[%s0 + $0xc8] sm:$0xf]
  %v204 = vld [vmem:[%s0 + $0xcc] sm:$0xf]
  %v205 = vld [vmem:[%s0 + $0xd0] sm:$0xf]
  %v206 = vld [vmem:[%s0 + $0xd4] sm:$0xf]
  %v207 = vld [vmem:[%s0 + $0xd8] sm:$0xf]
  %v208 = vld [vmem:[%s0 + $0xdc] sm:$0xf]
  %v209 = vld [vmem:[%s0 + $0xe0] sm:$0xf]
  %v210 = vld [vmem:[%s0 + $0xe4] sm:$0xf]
  %v211 = vld [vmem:[%s0 + $0xe8] sm:$0xf]
  %v212 = vld [vmem:[%s0 + $0xec] sm:$0xf]
  %v213 = vld [vmem:[%s0 + $0xf0] sm:$0xf]
  %v214 = vld [vmem:[%s0 + $0xf4] sm:$0xf]
  %v215 = vld [vmem:[%s0 + $0xf8] sm:$0xf]
  %v216 = vld [vmem:[%s0 + $0xfc] sm:$0xf]
  %v217 = vld [vmem:[%s1] sm:$0xf]
  %v218 = vld [vmem:[%s1 + $0x4] sm:$0xf]
  %v219 = vld [vmem:[%s1 + $0x8] sm:$0xf]
  %v220 = vld [vmem:[%s1 + $0xc] sm:$0xf]
  %v221 = vld [vmem:[%s1 + $0x10] sm:$0xf]
  %v222 = vld [vmem:[%s1 + $0x14] sm:$0xf]
  %v223 = vld [vmem:[%s1 + $0x18] sm:$0xf]
  %v224 = vld [vmem:[%s1 + $0x1c] sm:$0xf]
  %v225 = vld [vmem:[%s1 + $0x20] sm:$0xf]
  %v226 = vld [vmem:[%s1 + $0x24] sm:$0xf]
  %v227 = vld [vmem:[%s1 + $0x28] sm:$0xf]
  %v228 = vld [vmem:[%s1 + $0x2c] sm:$0xf]
  %v229 = vld [vmem:[%s1 + $0x30] sm:$0xf]
  %v230 = vld [vmem:[%s1 + $0x34] sm:$0xf]
  %v231 = vld [vmem:[%s1 + $0x38] sm:$0xf]
  %v232 = vld [vmem:[%s1 + $0x3c] sm:$0xf]
  %v297 = vunpack.c.l.b16 %v153
  %v298 = vunpack.c.l.b16 %v154
  %v299 = vunpack.c.l.b16 %v155
  %v300 = vunpack.c.l.b16 %v156
  %v301 = vunpack.c.l.b16 %v157
  %v302 = vunpack.c.l.b16 %v158
  %v303 = vunpack.c.l.b16 %v159
  %v304 = vunpack.c.l.b16 %v160
  %v305 = vunpack.c.l.b16 %v161
  %v306 = vunpack.c.l.b16 %v162
  %v307 = vunpack.c.l.b16 %v163
  %v308 = vunpack.c.l.b16 %v164
  %v309 = vunpack.c.l.b16 %v165
  %v310 = vunpack.c.l.b16 %v166
  %v311 = vunpack.c.l.b16 %v167
  %v312 = vunpack.c.l.b16 %v168
  %v313 = vunpack.c.l.b16 %v169
  %v314 = vunpack.c.l.b16 %v170
  %v315 = vunpack.c.l.b16 %v171
  %v316 = vunpack.c.l.b16 %v172
  %v317 = vunpack.c.l.b16 %v173
  %v318 = vunpack.c.l.b16 %v174
  %v319 = vunpack.c.l.b16 %v175
  %v320 = vunpack.c.l.b16 %v176
  %v321 = vunpack.c.l.b16 %v177
  %v322 = vunpack.c.l.b16 %v178
  %v323 = vunpack.c.l.b16 %v179
  %v324 = vunpack.c.l.b16 %v180
  %v325 = vunpack.c.l.b16 %v181
  %v326 = vunpack.c.l.b16 %v182
  %v327 = vunpack.c.l.b16 %v183
  %v328 = vunpack.c.l.b16 %v184
  %v329 = vunpack.c.l.b16 %v185
  %v330 = vunpack.c.l.b16 %v186
  %v331 = vunpack.c.l.b16 %v187
  %v332 = vunpack.c.l.b16 %v188
  %v333 = vunpack.c.l.b16 %v189
  %v334 = vunpack.c.l.b16 %v190
  %v335 = vunpack.c.l.b16 %v191
  %v336 = vunpack.c.l.b16 %v192
  %v337 = vunpack.c.l.b16 %v193
  %v338 = vunpack.c.l.b16 %v194
  %v339 = vunpack.c.l.b16 %v195
  %v340 = vunpack.c.l.b16 %v196
  %v341 = vunpack.c.l.b16 %v197
  %v342 = vunpack.c.l.b16 %v198
  %v343 = vunpack.c.l.b16 %v199
  %v344 = vunpack.c.l.b16 %v200
  %v345 = vunpack.c.l.b16 %v201
  %v346 = vunpack.c.l.b16 %v202
  %v347 = vunpack.c.l.b16 %v203
  %v348 = vunpack.c.l.b16 %v204
  %v349 = vunpack.c.l.b16 %v205
  %v350 = vunpack.c.l.b16 %v206
  %v351 = vunpack.c.l.b16 %v207
  %v352 = vunpack.c.l.b16 %v208
  %v353 = vunpack.c.l.b16 %v209
  %v354 = vunpack.c.l.b16 %v210
  %v355 = vunpack.c.l.b16 %v211
  %v356 = vunpack.c.l.b16 %v212
  %v357 = vunpack.c.l.b16 %v213
  %v358 = vunpack.c.l.b16 %v214
  %v359 = vunpack.c.l.b16 %v215
  %v360 = vunpack.c.l.b16 %v216
  %v361 = vpack.c.b16 %v298, %v297
  %v362 = vpack.c.b16 %v300, %v299
  %v363 = vpack.c.b16 %v302, %v301
  %v364 = vpack.c.b16 %v304, %v303
  %v365 = vpack.c.b16 %v306, %v305
  %v366 = vpack.c.b16 %v308, %v307
  %v367 = vpack.c.b16 %v310, %v309
  %v368 = vpack.c.b16 %v312, %v311
  %v369 = vpack.c.b16 %v314, %v313
  %v370 = vpack.c.b16 %v316, %v315
  %v371 = vpack.c.b16 %v318, %v317
  %v372 = vpack.c.b16 %v320, %v319
  %v373 = vpack.c.b16 %v322, %v321
  %v374 = vpack.c.b16 %v324, %v323
  %v375 = vpack.c.b16 %v326, %v325
  %v376 = vpack.c.b16 %v328, %v327
  %v377 = vpack.c.b16 %v330, %v329
  %v378 = vpack.c.b16 %v332, %v331
  %v379 = vpack.c.b16 %v334, %v333
  %v380 = vpack.c.b16 %v336, %v335
  %v381 = vpack.c.b16 %v338, %v337
  %v382 = vpack.c.b16 %v340, %v339
  %v383 = vpack.c.b16 %v342, %v341
  %v384 = vpack.c.b16 %v344, %v343
  %v385 = vpack.c.b16 %v346, %v345
  %v386 = vpack.c.b16 %v348, %v347
  %v387 = vpack.c.b16 %v350, %v349
  %v388 = vpack.c.b16 %v352, %v351
  %v389 = vpack.c.b16 %v354, %v353
  %v390 = vpack.c.b16 %v356, %v355
  %v391 = vpack.c.b16 %v358, %v357
  %v392 = vpack.c.b16 %v360, %v359
  %v441 = vunpack.c.l.b16 %v217
  %v442 = vunpack.c.l.b16 %v218
  %v443 = vunpack.c.l.b16 %v219
  %v444 = vunpack.c.l.b16 %v220
  %v445 = vunpack.c.l.b16 %v221
  %v446 = vunpack.c.l.b16 %v222
  %v447 = vunpack.c.l.b16 %v223
  %v448 = vunpack.c.l.b16 %v224
  %v449 = vunpack.c.l.b16 %v225
  %v450 = vunpack.c.l.b16 %v226
  %v451 = vunpack.c.l.b16 %v227
  %v452 = vunpack.c.l.b16 %v228
  %v453 = vunpack.c.l.b16 %v229
  %v454 = vunpack.c.l.b16 %v230
  %v455 = vunpack.c.l.b16 %v231
  %v456 = vunpack.c.l.b16 %v232
  %v457 = vpack.c.b16 %v442, %v441
  %v458 = vpack.c.b16 %v444, %v443
  %v459 = vpack.c.b16 %v446, %v445
  %v460 = vpack.c.b16 %v448, %v447
  %v461 = vpack.c.b16 %v450, %v449
  %v462 = vpack.c.b16 %v452, %v451
  %v463 = vpack.c.b16 %v454, %v453
  %v464 = vpack.c.b16 %v456, %v455
  %473 = vmatprep.subr.bf16.mxu0 0
  %474 = vmatpush1.bf16.msra.mxu0 %v464
  %475 = vmatprep.subr.bf16.mxu0 0
  %476 = vmatpush1.bf16.msra.mxu0 %v463
  %477 = vmatprep.subr.bf16.mxu0 0
  %478 = vmatpush1.bf16.msra.mxu0 %v462
  %479 = vmatprep.subr.bf16.mxu0 0
  %480 = vmatpush1.bf16.msra.mxu0 %v461
  %481 = vmatprep.subr.bf16.mxu0 0
  %482 = vmatpush1.bf16.msra.mxu0 %v460
  %483 = vmatprep.subr.bf16.mxu0 0
  %484 = vmatpush1.bf16.msra.mxu0 %v459
  %485 = vmatprep.subr.bf16.mxu0 0
  %486 = vmatpush1.bf16.msra.mxu0 %v458
  %487 = vmatprep.subr.bf16.mxu0 0
  %488 = vmatpush1.bf16.msra.mxu0 %v457
  %489 = vmatprep.subr.bf16.mxu0 0
  %490 = vmatpush2.bf16.msra.mxu0 0
  %491 = vmatprep.subr.bf16.mxu0 0
  %492 = vmatpush2.bf16.msra.mxu0 0
  %493 = vmatprep.subr.bf16.mxu0 0
  %494 = vmatpush2.bf16.msra.mxu0 0
  %495 = vmatprep.subr.bf16.mxu0 0
  %496 = vmatpush2.bf16.msra.mxu0 0
  %497 = vmatprep.subr.bf16.mxu0 0
  %498 = vmatpush2.bf16.msra.mxu0 0
  %499 = vmatprep.subr.bf16.mxu0 0
  %500 = vmatpush2.bf16.msra.mxu0 0
  %501 = vmatprep.subr.bf16.mxu0 0
  %502 = vmatpush2.bf16.msra.mxu0 0
  %503 = vmatprep.subr.bf16.mxu0 0
  %504 = vmatpush2.bf16.msra.mxu0 0
  %505 = vmatprep.mubr.bf16.mxu0 0
  %506 = vmatmul.mubr.bf16.gmra.mxu0 %v361
  %v507 = vpop.f32.mrf.mxu0
  %v508 = vadd.f32 0.0, %v507
  %v509 = vpop.f32.mrf.mxu0
  %v510 = vpop.f32.mrf.mxu0
  %v511 = vadd.f32 0.0, %v510
  %v512 = vpop.f32.mrf.mxu0
  %513 = vmatprep.mubr.bf16.mxu0 0
  %514 = vmatmul.mubr.bf16.gmra.mxu0 %v362
  %v515 = vpop.f32.mrf.mxu0
  %v516 = vadd.f32 0.0, %v515
  %v517 = vpop.f32.mrf.mxu0
  %v518 = vpop.f32.mrf.mxu0
  %v519 = vadd.f32 0.0, %v518
  %v520 = vpop.f32.mrf.mxu0
  %521 = vmatprep.mubr.bf16.mxu0 0
  %522 = vmatmul.mubr.bf16.gmra.mxu0 %v363
  %v523 = vpop.f32.mrf.mxu0
  %v524 = vadd.f32 0.0, %v523
  %v525 = vpop.f32.mrf.mxu0
  %v526 = vpop.f32.mrf.mxu0
  %v527 = vadd.f32 0.0, %v526
  %v528 = vpop.f32.mrf.mxu0
  %529 = vmatprep.mubr.bf16.mxu0 0
  %530 = vmatmul.mubr.bf16.gmra.mxu0 %v364
  %v531 = vpop.f32.mrf.mxu0
  %v532 = vadd.f32 0.0, %v531
  %v533 = vpop.f32.mrf.mxu0
  %v534 = vpop.f32.mrf.mxu0
  %v535 = vadd.f32 0.0, %v534
  %v536 = vpop.f32.mrf.mxu0
  %537 = vmatprep.mubr.bf16.mxu0 0
  %538 = vmatmul.mubr.bf16.gmra.mxu0 %v365
  %v539 = vpop.f32.mrf.mxu0
  %v540 = vadd.f32 0.0, %v539
  %v541 = vpop.f32.mrf.mxu0
  %v542 = vpop.f32.mrf.mxu0
  %v543 = vadd.f32 0.0, %v542
  %v544 = vpop.f32.mrf.mxu0
  %545 = vmatprep.mubr.bf16.mxu0 0
  %546 = vmatmul.mubr.bf16.gmra.mxu0 %v366
  %v547 = vpop.f32.mrf.mxu0
  %v548 = vadd.f32 0.0, %v547
  %v549 = vpop.f32.mrf.mxu0
  %v550 = vpop.f32.mrf.mxu0
  %v551 = vadd.f32 0.0, %v550
  %v552 = vpop.f32.mrf.mxu0
  %553 = vmatprep.mubr.bf16.mxu0 0
  %554 = vmatmul.mubr.bf16.gmra.mxu0 %v367
  %v555 = vpop.f32.mrf.mxu0
  %v556 = vadd.f32 0.0, %v555
  %v557 = vpop.f32.mrf.mxu0
  %v558 = vpop.f32.mrf.mxu0
  %v559 = vadd.f32 0.0, %v558
  %v560 = vpop.f32.mrf.mxu0
  %561 = vmatprep.mubr.bf16.mxu0 0
  %562 = vmatmul.mubr.bf16.gmra.mxu0 %v368
  %v563 = vpop.f32.mrf.mxu0
  %v564 = vadd.f32 0.0, %v563
  %v565 = vpop.f32.mrf.mxu0
  %v566 = vpop.f32.mrf.mxu0
  %v567 = vadd.f32 0.0, %v566
  %v568 = vpop.f32.mrf.mxu0
  %569 = vmatprep.mubr.bf16.mxu0 0
  %570 = vmatmul.mubr.bf16.gmra.mxu0 %v369
  %v571 = vpop.f32.mrf.mxu0
  %v572 = vadd.f32 0.0, %v571
  %v573 = vpop.f32.mrf.mxu0
  %v574 = vpop.f32.mrf.mxu0
  %v575 = vadd.f32 0.0, %v574
  %v576 = vpop.f32.mrf.mxu0
  %577 = vmatprep.mubr.bf16.mxu0 0
  %578 = vmatmul.mubr.bf16.gmra.mxu0 %v370
  %v579 = vpop.f32.mrf.mxu0
  %v580 = vadd.f32 0.0, %v579
  %v581 = vpop.f32.mrf.mxu0
  %v582 = vpop.f32.mrf.mxu0
  %v583 = vadd.f32 0.0, %v582
  %v584 = vpop.f32.mrf.mxu0
  %585 = vmatprep.mubr.bf16.mxu0 0
  %586 = vmatmul.mubr.bf16.gmra.mxu0 %v371
  %v587 = vpop.f32.mrf.mxu0
  %v588 = vadd.f32 0.0, %v587
  %v589 = vpop.f32.mrf.mxu0
  %v590 = vpop.f32.mrf.mxu0
  %v591 = vadd.f32 0.0, %v590
  %v592 = vpop.f32.mrf.mxu0
  %593 = vmatprep.mubr.bf16.mxu0 0
  %594 = vmatmul.mubr.bf16.gmra.mxu0 %v372
  %v595 = vpop.f32.mrf.mxu0
  %v596 = vadd.f32 0.0, %v595
  %v597 = vpop.f32.mrf.mxu0
  %v598 = vpop.f32.mrf.mxu0
  %v599 = vadd.f32 0.0, %v598
  %v600 = vpop.f32.mrf.mxu0
  %601 = vmatprep.mubr.bf16.mxu0 0
  %602 = vmatmul.mubr.bf16.gmra.mxu0 %v373
  %v603 = vpop.f32.mrf.mxu0
  %v604 = vadd.f32 0.0, %v603
  %v605 = vpop.f32.mrf.mxu0
  %v606 = vpop.f32.mrf.mxu0
  %v607 = vadd.f32 0.0, %v606
  %v608 = vpop.f32.mrf.mxu0
  %609 = vmatprep.mubr.bf16.mxu0 0
  %610 = vmatmul.mubr.bf16.gmra.mxu0 %v374
  %v611 = vpop.f32.mrf.mxu0
  %v612 = vadd.f32 0.0, %v611
  %v613 = vpop.f32.mrf.mxu0
  %v614 = vpop.f32.mrf.mxu0
  %v615 = vadd.f32 0.0, %v614
  %v616 = vpop.f32.mrf.mxu0
  %617 = vmatprep.mubr.bf16.mxu0 0
  %618 = vmatmul.mubr.bf16.gmra.mxu0 %v375
  %v619 = vpop.f32.mrf.mxu0
  %v620 = vadd.f32 0.0, %v619
  %v621 = vpop.f32.mrf.mxu0
  %v622 = vpop.f32.mrf.mxu0
  %v623 = vadd.f32 0.0, %v622
  %v624 = vpop.f32.mrf.mxu0
  %625 = vmatprep.mubr.bf16.mxu0 0
  %626 = vmatmul.mubr.bf16.gmra.mxu0 %v376
  %v627 = vpop.f32.mrf.mxu0
  %v628 = vadd.f32 0.0, %v627
  %v629 = vpop.f32.mrf.mxu0
  %v630 = vpop.f32.mrf.mxu0
  %v631 = vadd.f32 0.0, %v630
  %v632 = vpop.f32.mrf.mxu0
  %633 = vmatprep.mubr.bf16.mxu0 0
  %634 = vmatmul.mubr.bf16.gmra.mxu0 %v377
  %v635 = vpop.f32.mrf.mxu0
  %v636 = vadd.f32 0.0, %v635
  %v637 = vpop.f32.mrf.mxu0
  %v638 = vpop.f32.mrf.mxu0
  %v639 = vadd.f32 0.0, %v638
  %v640 = vpop.f32.mrf.mxu0
  %641 = vmatprep.mubr.bf16.mxu0 0
  %642 = vmatmul.mubr.bf16.gmra.mxu0 %v378
  %v643 = vpop.f32.mrf.mxu0
  %v644 = vadd.f32 0.0, %v643
  %v645 = vpop.f32.mrf.mxu0
  %v646 = vpop.f32.mrf.mxu0
  %v647 = vadd.f32 0.0, %v646
  %v648 = vpop.f32.mrf.mxu0
  %649 = vmatprep.mubr.bf16.mxu0 0
  %650 = vmatmul.mubr.bf16.gmra.mxu0 %v379
  %v651 = vpop.f32.mrf.mxu0
  %v652 = vadd.f32 0.0, %v651
  %v653 = vpop.f32.mrf.mxu0
  %v654 = vpop.f32.mrf.mxu0
  %v655 = vadd.f32 0.0, %v654
  %v656 = vpop.f32.mrf.mxu0
  %657 = vmatprep.mubr.bf16.mxu0 0
  %658 = vmatmul.mubr.bf16.gmra.mxu0 %v380
  %v659 = vpop.f32.mrf.mxu0
  %v660 = vadd.f32 0.0, %v659
  %v661 = vpop.f32.mrf.mxu0
  %v662 = vpop.f32.mrf.mxu0
  %v663 = vadd.f32 0.0, %v662
  %v664 = vpop.f32.mrf.mxu0
  %665 = vmatprep.mubr.bf16.mxu0 0
  %666 = vmatmul.mubr.bf16.gmra.mxu0 %v381
  %v667 = vpop.f32.mrf.mxu0
  %v668 = vadd.f32 0.0, %v667
  %v669 = vpop.f32.mrf.mxu0
  %v670 = vpop.f32.mrf.mxu0
  %v671 = vadd.f32 0.0, %v670
  %v672 = vpop.f32.mrf.mxu0
  %673 = vmatprep.mubr.bf16.mxu0 0
  %674 = vmatmul.mubr.bf16.gmra.mxu0 %v382
  %v675 = vpop.f32.mrf.mxu0
  %v676 = vadd.f32 0.0, %v675
  %v677 = vpop.f32.mrf.mxu0
  %v678 = vpop.f32.mrf.mxu0
  %v679 = vadd.f32 0.0, %v678
  %v680 = vpop.f32.mrf.mxu0
  %681 = vmatprep.mubr.bf16.mxu0 0
  %682 = vmatmul.mubr.bf16.gmra.mxu0 %v383
  %v683 = vpop.f32.mrf.mxu0
  %v684 = vadd.f32 0.0, %v683
  %v685 = vpop.f32.mrf.mxu0
  %v686 = vpop.f32.mrf.mxu0
  %v687 = vadd.f32 0.0, %v686
  %v688 = vpop.f32.mrf.mxu0
  %689 = vmatprep.mubr.bf16.mxu0 0
  %690 = vmatmul.mubr.bf16.gmra.mxu0 %v384
  %v691 = vpop.f32.mrf.mxu0
  %v692 = vadd.f32 0.0, %v691
  %v693 = vpop.f32.mrf.mxu0
  %v694 = vpop.f32.mrf.mxu0
  %v695 = vadd.f32 0.0, %v694
  %v696 = vpop.f32.mrf.mxu0
  %697 = vmatprep.mubr.bf16.mxu0 0
  %698 = vmatmul.mubr.bf16.gmra.mxu0 %v385
  %v699 = vpop.f32.mrf.mxu0
  %v700 = vadd.f32 0.0, %v699
  %v701 = vpop.f32.mrf.mxu0
  %v702 = vpop.f32.mrf.mxu0
  %v703 = vadd.f32 0.0, %v702
  %v704 = vpop.f32.mrf.mxu0
  %705 = vmatprep.mubr.bf16.mxu0 0
  %706 = vmatmul.mubr.bf16.gmra.mxu0 %v386
  %v707 = vpop.f32.mrf.mxu0
  %v708 = vadd.f32 0.0, %v707
  %v709 = vpop.f32.mrf.mxu0
  %v710 = vpop.f32.mrf.mxu0
  %v711 = vadd.f32 0.0, %v710
  %v712 = vpop.f32.mrf.mxu0
  %713 = vmatprep.mubr.bf16.mxu0 0
  %714 = vmatmul.mubr.bf16.gmra.mxu0 %v387
  %v715 = vpop.f32.mrf.mxu0
  %v716 = vadd.f32 0.0, %v715
  %v717 = vpop.f32.mrf.mxu0
  %v718 = vpop.f32.mrf.mxu0
  %v719 = vadd.f32 0.0, %v718
  %v720 = vpop.f32.mrf.mxu0
  %721 = vmatprep.mubr.bf16.mxu0 0
  %722 = vmatmul.mubr.bf16.gmra.mxu0 %v388
  %v723 = vpop.f32.mrf.mxu0
  %v724 = vadd.f32 0.0, %v723
  %v725 = vpop.f32.mrf.mxu0
  %v726 = vpop.f32.mrf.mxu0
  %v727 = vadd.f32 0.0, %v726
  %v728 = vpop.f32.mrf.mxu0
  %729 = vmatprep.mubr.bf16.mxu0 0
  %730 = vmatmul.mubr.bf16.gmra.mxu0 %v389
  %v731 = vpop.f32.mrf.mxu0
  %v732 = vadd.f32 0.0, %v731
  %v733 = vpop.f32.mrf.mxu0
  %v734 = vpop.f32.mrf.mxu0
  %v735 = vadd.f32 0.0, %v734
  %v736 = vpop.f32.mrf.mxu0
  %737 = vmatprep.mubr.bf16.mxu0 0
  %738 = vmatmul.mubr.bf16.gmra.mxu0 %v390
  %v739 = vpop.f32.mrf.mxu0
  %v740 = vadd.f32 0.0, %v739
  %v741 = vpop.f32.mrf.mxu0
  %v742 = vpop.f32.mrf.mxu0
  %v743 = vadd.f32 0.0, %v742
  %v744 = vpop.f32.mrf.mxu0
  %745 = vmatprep.mubr.bf16.mxu0 0
  %746 = vmatmul.mubr.bf16.gmra.mxu0 %v391
  %v747 = vpop.f32.mrf.mxu0
  %v748 = vadd.f32 0.0, %v747
  %v749 = vpop.f32.mrf.mxu0
  %v750 = vpop.f32.mrf.mxu0
  %v751 = vadd.f32 0.0, %v750
  %v752 = vpop.f32.mrf.mxu0
  %753 = vmatprep.mubr.bf16.mxu0 0
  %754 = vmatmul.mubr.bf16.gmra.mxu0 %v392
  %v755 = vpop.f32.mrf.mxu0
  %v756 = vadd.f32 0.0, %v755
  %v757 = vpop.f32.mrf.mxu0
  %v758 = vpop.f32.mrf.mxu0
  %v759 = vadd.f32 0.0, %v758
  %v760 = vpop.f32.mrf.mxu0
  %761 = vdwg.mxu0
  %v762 = vadd.f32 %v89, %v508
  %v763 = vadd.f32 %v90, %v511
  %v764 = vadd.f32 %v91, %v516
  %v765 = vadd.f32 %v92, %v519
  %v766 = vadd.f32 %v93, %v524
  %v767 = vadd.f32 %v94, %v527
  %v768 = vadd.f32 %v95, %v532
  %v769 = vadd.f32 %v96, %v535
  %v770 = vadd.f32 %v97, %v540
  %v771 = vadd.f32 %v98, %v543
  %v772 = vadd.f32 %v99, %v548
  %v773 = vadd.f32 %v100, %v551
  %v774 = vadd.f32 %v101, %v556
  %v775 = vadd.f32 %v102, %v559
  %v776 = vadd.f32 %v103, %v564
  %v777 = vadd.f32 %v104, %v567
  %v778 = vadd.f32 %v105, %v572
  %v779 = vadd.f32 %v106, %v575
  %v780 = vadd.f32 %v107, %v580
  %v781 = vadd.f32 %v108, %v583
  %v782 = vadd.f32 %v109, %v588
  %v783 = vadd.f32 %v110, %v591
  %v784 = vadd.f32 %v111, %v596
  %v785 = vadd.f32 %v112, %v599
  %v786 = vadd.f32 %v113, %v604
  %v787 = vadd.f32 %v114, %v607
  %v788 = vadd.f32 %v115, %v612
  %v789 = vadd.f32 %v116, %v615
  %v790 = vadd.f32 %v117, %v620
  %v791 = vadd.f32 %v118, %v623
  %v792 = vadd.f32 %v119, %v628
  %v793 = vadd.f32 %v120, %v631
  %v794 = vadd.f32 %v121, %v636
  %v795 = vadd.f32 %v122, %v639
  %v796 = vadd.f32 %v123, %v644
  %v797 = vadd.f32 %v124, %v647
  %v798 = vadd.f32 %v125, %v652
  %v799 = vadd.f32 %v126, %v655
  %v800 = vadd.f32 %v127, %v660
  %v801 = vadd.f32 %v128, %v663
  %v802 = vadd.f32 %v129, %v668
  %v803 = vadd.f32 %v130, %v671
  %v804 = vadd.f32 %v131, %v676
  %v805 = vadd.f32 %v132, %v679
  %v806 = vadd.f32 %v133, %v684
  %v807 = vadd.f32 %v134, %v687
  %v808 = vadd.f32 %v135, %v692
  %v809 = vadd.f32 %v136, %v695
  %v810 = vadd.f32 %v137, %v700
  %v811 = vadd.f32 %v138, %v703
  %v812 = vadd.f32 %v139, %v708
  %v813 = vadd.f32 %v140, %v711
  %v814 = vadd.f32 %v141, %v716
  %v815 = vadd.f32 %v142, %v719
  %v816 = vadd.f32 %v143, %v724
  %v817 = vadd.f32 %v144, %v727
  %v818 = vadd.f32 %v145, %v732
  %v819 = vadd.f32 %v146, %v735
  %v820 = vadd.f32 %v147, %v740
  %v821 = vadd.f32 %v148, %v743
  %v822 = vadd.f32 %v149, %v748
  %v823 = vadd.f32 %v150, %v751
  %v824 = vadd.f32 %v151, %v756
  %v825 = vadd.f32 %v152, %v759
  %826 = vst [vmem:[#allocation2] sm:$0xff] %v762
  %827 = vst [vmem:[#allocation2 + $0x8] sm:$0xff] %v763
  %828 = vst [vmem:[#allocation2 + $0x10] sm:$0xff] %v764
  %829 = vst [vmem:[#allocation2 + $0x18] sm:$0xff] %v765
  %830 = vst [vmem:[#allocation2 + $0x20] sm:$0xff] %v766
  %831 = vst [vmem:[#allocation2 + $0x28] sm:$0xff] %v767
  %832 = vst [vmem:[#allocation2 + $0x30] sm:$0xff] %v768
  %833 = vst [vmem:[#allocation2 + $0x38] sm:$0xff] %v769
  %834 = vst [vmem:[#allocation2 + $0x40] sm:$0xff] %v770
  %835 = vst [vmem:[#allocation2 + $0x48] sm:$0xff] %v771
  %836 = vst [vmem:[#allocation2 + $0x50] sm:$0xff] %v772
  %837 = vst [vmem:[#allocation2 + $0x58] sm:$0xff] %v773
  %838 = vst [vmem:[#allocation2 + $0x60] sm:$0xff] %v774
  %839 = vst [vmem:[#allocation2 + $0x68] sm:$0xff] %v775
  %840 = vst [vmem:[#allocation2 + $0x70] sm:$0xff] %v776
  %841 = vst [vmem:[#allocation2 + $0x78] sm:$0xff] %v777
  %842 = vst [vmem:[#allocation2 + $0x80] sm:$0xff] %v778
  %843 = vst [vmem:[#allocation2 + $0x88] sm:$0xff] %v779
  %844 = vst [vmem:[#allocation2 + $0x90] sm:$0xff] %v780
  %845 = vst [vmem:[#allocation2 + $0x98] sm:$0xff] %v781
  %846 = vst [vmem:[#allocation2 + $0xa0] sm:$0xff] %v782
  %847 = vst [vmem:[#allocation2 + $0xa8] sm:$0xff] %v783
  %848 = vst [vmem:[#allocation2 + $0xb0] sm:$0xff] %v784
  %849 = vst [vmem:[#allocation2 + $0xb8] sm:$0xff] %v785
  %850 = vst [vmem:[#allocation2 + $0xc0] sm:$0xff] %v786
  %851 = vst [vmem:[#allocation2 + $0xc8] sm:$0xff] %v787
  %852 = vst [vmem:[#allocation2 + $0xd0] sm:$0xff] %v788
  %853 = vst [vmem:[#allocation2 + $0xd8] sm:$0xff] %v789
  %854 = vst [vmem:[#allocation2 + $0xe0] sm:$0xff] %v790
  %855 = vst [vmem:[#allocation2 + $0xe8] sm:$0xff] %v791
  %856 = vst [vmem:[#allocation2 + $0xf0] sm:$0xff] %v792
  %857 = vst [vmem:[#allocation2 + $0xf8] sm:$0xff] %v793
  %858 = vst [vmem:[#allocation2 + $0x100] sm:$0xff] %v794
  %859 = vst [vmem:[#allocation2 + $0x108] sm:$0xff] %v795
  %860 = vst [vmem:[#allocation2 + $0x110] sm:$0xff] %v796
  %861 = vst [vmem:[#allocation2 + $0x118] sm:$0xff] %v797
  %862 = vst [vmem:[#allocation2 + $0x120] sm:$0xff] %v798
  %863 = vst [vmem:[#allocation2 + $0x128] sm:$0xff] %v799
  %864 = vst [vmem:[#allocation2 + $0x130] sm:$0xff] %v800
  %865 = vst [vmem:[#allocation2 + $0x138] sm:$0xff] %v801
  %866 = vst [vmem:[#allocation2 + $0x140] sm:$0xff] %v802
  %867 = vst [vmem:[#allocation2 + $0x148] sm:$0xff] %v803
  %868 = vst [vmem:[#allocation2 + $0x150] sm:$0xff] %v804
  %869 = vst [vmem:[#allocation2 + $0x158] sm:$0xff] %v805
  %870 = vst [vmem:[#allocation2 + $0x160] sm:$0xff] %v806
  %871 = vst [vmem:[#allocation2 + $0x168] sm:$0xff] %v807
  %872 = vst [vmem:[#allocation2 + $0x170] sm:$0xff] %v808
  %873 = vst [vmem:[#allocation2 + $0x178] sm:$0xff] %v809
  %874 = vst [vmem:[#allocation2 + $0x180] sm:$0xff] %v810
  %875 = vst [vmem:[#allocation2 + $0x188] sm:$0xff] %v811
  %876 = vst [vmem:[#allocation2 + $0x190] sm:$0xff] %v812
  %877 = vst [vmem:[#allocation2 + $0x198] sm:$0xff] %v813
  %878 = vst [vmem:[#allocation2 + $0x1a0] sm:$0xff] %v814
  %879 = vst [vmem:[#allocation2 + $0x1a8] sm:$0xff] %v815
  %880 = vst [vmem:[#allocation2 + $0x1b0] sm:$0xff] %v816
  %881 = vst [vmem:[#allocation2 + $0x1b8] sm:$0xff] %v817
  %882 = vst [vmem:[#allocation2 + $0x1c0] sm:$0xff] %v818
  %883 = vst [vmem:[#allocation2 + $0x1c8] sm:$0xff] %v819
  %884 = vst [vmem:[#allocation2 + $0x1d0] sm:$0xff] %v820
  %885 = vst [vmem:[#allocation2 + $0x1d8] sm:$0xff] %v821
  %886 = vst [vmem:[#allocation2 + $0x1e0] sm:$0xff] %v822
  %887 = vst [vmem:[#allocation2 + $0x1e8] sm:$0xff] %v823
  %888 = vst [vmem:[#allocation2 + $0x1f0] sm:$0xff] %v824
  %889 = vst [vmem:[#allocation2 + $0x1f8] sm:$0xff] %v825
  // Predicated region
  $region26: #{basic_block_forward.3} parent=0 // pred_check
    %p890 = pneg %p21
  $region27: #{basic_block_forward.3} parent=0 // pred_check_branch
    %892 = sbr.rel (%p890) target = $region29
  $region28: #{basic_block_forward.3} parent=0 // pred_region
    %v893 = vld [vmem:[#allocation2] sm:$0xff]
    %v894 = vld [vmem:[#allocation2 + $0x8] sm:$0xff]
    %v895 = vld [vmem:[#allocation2 + $0x10] sm:$0xff]
    %v896 = vld [vmem:[#allocation2 + $0x18] sm:$0xff]
    %v897 = vld [vmem:[#allocation2 + $0x20] sm:$0xff]
    %v898 = vld [vmem:[#allocation2 + $0x28] sm:$0xff]
    %v899 = vld [vmem:[#allocation2 + $0x30] sm:$0xff]
    %v900 = vld [vmem:[#allocation2 + $0x38] sm:$0xff]
    %v901 = vld [vmem:[#allocation2 + $0x40] sm:$0xff]
    %v902 = vld [vmem:[#allocation2 + $0x48] sm:$0xff]
    %v903 = vld [vmem:[#allocation2 + $0x50] sm:$0xff]
    %v904 = vld [vmem:[#allocation2 + $0x58] sm:$0xff]
    %v905 = vld [vmem:[#allocation2 + $0x60] sm:$0xff]
    %v906 = vld [vmem:[#allocation2 + $0x68] sm:$0xff]
    %v907 = vld [vmem:[#allocation2 + $0x70] sm:$0xff]
    %v908 = vld [vmem:[#allocation2 + $0x78] sm:$0xff]
    %v909 = vld [vmem:[#allocation2 + $0x80] sm:$0xff]
    %v910 = vld [vmem:[#allocation2 + $0x88] sm:$0xff]
    %v911 = vld [vmem:[#allocation2 + $0x90] sm:$0xff]
    %v912 = vld [vmem:[#allocation2 + $0x98] sm:$0xff]
    %v913 = vld [vmem:[#allocation2 + $0xa0] sm:$0xff]
    %v914 = vld [vmem:[#allocation2 + $0xa8] sm:$0xff]
    %v915 = vld [vmem:[#allocation2 + $0xb0] sm:$0xff]
    %v916 = vld [vmem:[#allocation2 + $0xb8] sm:$0xff]
    %v917 = vld [vmem:[#allocation2 + $0xc0] sm:$0xff]
    %v918 = vld [vmem:[#allocation2 + $0xc8] sm:$0xff]
    %v919 = vld [vmem:[#allocation2 + $0xd0] sm:$0xff]
    %v920 = vld [vmem:[#allocation2 + $0xd8] sm:$0xff]
    %v921 = vld [vmem:[#allocation2 + $0xe0] sm:$0xff]
    %v922 = vld [vmem:[#allocation2 + $0xe8] sm:$0xff]
    %v923 = vld [vmem:[#allocation2 + $0xf0] sm:$0xff]
    %v924 = vld [vmem:[#allocation2 + $0xf8] sm:$0xff]
    %v925 = vld [vmem:[#allocation2 + $0x100] sm:$0xff]
    %v926 = vld [vmem:[#allocation2 + $0x108] sm:$0xff]
    %v927 = vld [vmem:[#allocation2 + $0x110] sm:$0xff]
    %v928 = vld [vmem:[#allocation2 + $0x118] sm:$0xff]
    %v929 = vld [vmem:[#allocation2 + $0x120] sm:$0xff]
    %v930 = vld [vmem:[#allocation2 + $0x128] sm:$0xff]
    %v931 = vld [vmem:[#allocation2 + $0x130] sm:$0xff]
    %v932 = vld [vmem:[#allocation2 + $0x138] sm:$0xff]
    %v933 = vld [vmem:[#allocation2 + $0x140] sm:$0xff]
    %v934 = vld [vmem:[#allocation2 + $0x148] sm:$0xff]
    %v935 = vld [vmem:[#allocation2 + $0x150] sm:$0xff]
    %v936 = vld [vmem:[#allocation2 + $0x158] sm:$0xff]
    %v937 = vld [vmem:[#allocation2 + $0x160] sm:$0xff]
    %v938 = vld [vmem:[#allocation2 + $0x168] sm:$0xff]
    %v939 = vld [vmem:[#allocation2 + $0x170] sm:$0xff]
    %v940 = vld [vmem:[#allocation2 + $0x178] sm:$0xff]
    %v941 = vld [vmem:[#allocation2 + $0x180] sm:$0xff]
    %v942 = vld [vmem:[#allocation2 + $0x188] sm:$0xff]
    %v943 = vld [vmem:[#allocation2 + $0x190] sm:$0xff]
    %v944 = vld [vmem:[#allocation2 + $0x198] sm:$0xff]
    %v945 = vld [vmem:[#allocation2 + $0x1a0] sm:$0xff]
    %v946 = vld [vmem:[#allocation2 + $0x1a8] sm:$0xff]
    %v947 = vld [vmem:[#allocation2 + $0x1b0] sm:$0xff]
    %v948 = vld [vmem:[#allocation2 + $0x1b8] sm:$0xff]
    %v949 = vld [vmem:[#allocation2 + $0x1c0] sm:$0xff]
    %v950 = vld [vmem:[#allocation2 + $0x1c8] sm:$0xff]
    %v951 = vld [vmem:[#allocation2 + $0x1d0] sm:$0xff]
    %v952 = vld [vmem:[#allocation2 + $0x1d8] sm:$0xff]
    %v953 = vld [vmem:[#allocation2 + $0x1e0] sm:$0xff]
    %v954 = vld [vmem:[#allocation2 + $0x1e8] sm:$0xff]
    %v955 = vld [vmem:[#allocation2 + $0x1f0] sm:$0xff]
    %v956 = vld [vmem:[#allocation2 + $0x1f8] sm:$0xff]
    %v957 = vld [vmem:[%s2] sm:$0x1]
    %v959 = vlaneseq
    %v960 = vshrl.u32 %v959, 7
    %v961 = vsub.s32 0, %v960
    %v962 = vrot.slane %v957, %v961
    %v964 = vmul.f32 %v893, %v962
    %v965 = vmul.f32 %v894, %v962
    %v966 = vmul.f32 %v895, %v962
    %v967 = vmul.f32 %v896, %v962
    %v968 = vmul.f32 %v897, %v962
    %v969 = vmul.f32 %v898, %v962
    %v970 = vmul.f32 %v899, %v962
    %v971 = vmul.f32 %v900, %v962
    %v972 = vmul.f32 %v901, %v962
    %v973 = vmul.f32 %v902, %v962
    %v974 = vmul.f32 %v903, %v962
    %v975 = vmul.f32 %v904, %v962
    %v976 = vmul.f32 %v905, %v962
    %v977 = vmul.f32 %v906, %v962
    %v978 = vmul.f32 %v907, %v962
    %v979 = vmul.f32 %v908, %v962
    %v980 = vmul.f32 %v909, %v962
    %v981 = vmul.f32 %v910, %v962
    %v982 = vmul.f32 %v911, %v962
    %v983 = vmul.f32 %v912, %v962
    %v984 = vmul.f32 %v913, %v962
    %v985 = vmul.f32 %v914, %v962
    %v986 = vmul.f32 %v915, %v962
    %v987 = vmul.f32 %v916, %v962
    %v988 = vmul.f32 %v917, %v962
    %v989 = vmul.f32 %v918, %v962
    %v990 = vmul.f32 %v919, %v962
    %v991 = vmul.f32 %v920, %v962
    %v992 = vmul.f32 %v921, %v962
    %v993 = vmul.f32 %v922, %v962
    %v994 = vmul.f32 %v923, %v962
    %v995 = vmul.f32 %v924, %v962
    %v996 = vmul.f32 %v925, %v962
    %v997 = vmul.f32 %v926, %v962
    %v998 = vmul.f32 %v927, %v962
    %v999 = vmul.f32 %v928, %v962
    %v1000 = vmul.f32 %v929, %v962
    %v1001 = vmul.f32 %v930, %v962
    %v1002 = vmul.f32 %v931, %v962
    %v1003 = vmul.f32 %v932, %v962
    %v1004 = vmul.f32 %v933, %v962
    %v1005 = vmul.f32 %v934, %v962
    %v1006 = vmul.f32 %v935, %v962
    %v1007 = vmul.f32 %v936, %v962
    %v1008 = vmul.f32 %v937, %v962
    %v1009 = vmul.f32 %v938, %v962
    %v1010 = vmul.f32 %v939, %v962
    %v1011 = vmul.f32 %v940, %v962
    %v1012 = vmul.f32 %v941, %v962
    %v1013 = vmul.f32 %v942, %v962
    %v1014 = vmul.f32 %v943, %v962
    %v1015 = vmul.f32 %v944, %v962
    %v1016 = vmul.f32 %v945, %v962
    %v1017 = vmul.f32 %v946, %v962
    %v1018 = vmul.f32 %v947, %v962
    %v1019 = vmul.f32 %v948, %v962
    %v1020 = vmul.f32 %v949, %v962
    %v1021 = vmul.f32 %v950, %v962
    %v1022 = vmul.f32 %v951, %v962
    %v1023 = vmul.f32 %v952, %v962
    %v1024 = vmul.f32 %v953, %v962
    %v1025 = vmul.f32 %v954, %v962
    %v1026 = vmul.f32 %v955, %v962
    %v1027 = vmul.f32 %v956, %v962
    %v1028 = vld [vmem:[%s3] sm:$0x1]
    %v1030 = vlaneseq
    %v1031 = vshrl.u32 %v1030, 7
    %v1032 = vsub.s32 0, %v1031
    %v1033 = vrot.slane %v1028, %v1032
    %v1035 = vadd.f32 %v964, %v1033
    %v1036 = vadd.f32 %v965, %v1033
    %v1037 = vadd.f32 %v966, %v1033
    %v1038 = vadd.f32 %v967, %v1033
    %v1039 = vadd.f32 %v968, %v1033
    %v1040 = vadd.f32 %v969, %v1033
    %v1041 = vadd.f32 %v970, %v1033
    %v1042 = vadd.f32 %v971, %v1033
    %v1043 = vadd.f32 %v972, %v1033
    %v1044 = vadd.f32 %v973, %v1033
    %v1045 = vadd.f32 %v974, %v1033
    %v1046 = vadd.f32 %v975, %v1033
    %v1047 = vadd.f32 %v976, %v1033
    %v1048 = vadd.f32 %v977, %v1033
    %v1049 = vadd.f32 %v978, %v1033
    %v1050 = vadd.f32 %v979, %v1033
    %v1051 = vadd.f32 %v980, %v1033
    %v1052 = vadd.f32 %v981, %v1033
    %v1053 = vadd.f32 %v982, %v1033
    %v1054 = vadd.f32 %v983, %v1033
    %v1055 = vadd.f32 %v984, %v1033
    %v1056 = vadd.f32 %v985, %v1033
    %v1057 = vadd.f32 %v986, %v1033
    %v1058 = vadd.f32 %v987, %v1033
    %v1059 = vadd.f32 %v988, %v1033
    %v1060 = vadd.f32 %v989, %v1033
    %v1061 = vadd.f32 %v990, %v1033
    %v1062 = vadd.f32 %v991, %v1033
    %v1063 = vadd.f32 %v992, %v1033
    %v1064 = vadd.f32 %v993, %v1033
    %v1065 = vadd.f32 %v994, %v1033
    %v1066 = vadd.f32 %v995, %v1033
    %v1067 = vadd.f32 %v996, %v1033
    %v1068 = vadd.f32 %v997, %v1033
    %v1069 = vadd.f32 %v998, %v1033
    %v1070 = vadd.f32 %v999, %v1033
    %v1071 = vadd.f32 %v1000, %v1033
    %v1072 = vadd.f32 %v1001, %v1033
    %v1073 = vadd.f32 %v1002, %v1033
    %v1074 = vadd.f32 %v1003, %v1033
    %v1075 = vadd.f32 %v1004, %v1033
    %v1076 = vadd.f32 %v1005, %v1033
    %v1077 = vadd.f32 %v1006, %v1033
    %v1078 = vadd.f32 %v1007, %v1033
    %v1079 = vadd.f32 %v1008, %v1033
    %v1080 = vadd.f32 %v1009, %v1033
    %v1081 = vadd.f32 %v1010, %v1033
    %v1082 = vadd.f32 %v1011, %v1033
    %v1083 = vadd.f32 %v1012, %v1033
    %v1084 = vadd.f32 %v1013, %v1033
    %v1085 = vadd.f32 %v1014, %v1033
    %v1086 = vadd.f32 %v1015, %v1033
    %v1087 = vadd.f32 %v1016, %v1033
    %v1088 = vadd.f32 %v1017, %v1033
    %v1089 = vadd.f32 %v1018, %v1033
    %v1090 = vadd.f32 %v1019, %v1033
    %v1091 = vadd.f32 %v1020, %v1033
    %v1092 = vadd.f32 %v1021, %v1033
    %v1093 = vadd.f32 %v1022, %v1033
    %v1094 = vadd.f32 %v1023, %v1033
    %v1095 = vadd.f32 %v1024, %v1033
    %v1096 = vadd.f32 %v1025, %v1033
    %v1097 = vadd.f32 %v1026, %v1033
    %v1098 = vadd.f32 %v1027, %v1033
    %v1099 = vld [vmem:[%s4] sm:$0xff]
    %v1100 = vld [vmem:[%s4 + $0x8] sm:$0xff]
    %v1101 = vld [vmem:[%s4 + $0x10] sm:$0xff]
    %v1102 = vld [vmem:[%s4 + $0x18] sm:$0xff]
    %v1103 = vld [vmem:[%s4 + $0x20] sm:$0xff]
    %v1104 = vld [vmem:[%s4 + $0x28] sm:$0xff]
    %v1105 = vld [vmem:[%s4 + $0x30] sm:$0xff]
    %v1106 = vld [vmem:[%s4 + $0x38] sm:$0xff]
    %v1107 = vld [vmem:[%s4 + $0x40] sm:$0xff]
    %v1108 = vld [vmem:[%s4 + $0x48] sm:$0xff]
    %v1109 = vld [vmem:[%s4 + $0x50] sm:$0xff]
    %v1110 = vld [vmem:[%s4 + $0x58] sm:$0xff]
    %v1111 = vld [vmem:[%s4 + $0x60] sm:$0xff]
    %v1112 = vld [vmem:[%s4 + $0x68] sm:$0xff]
    %v1113 = vld [vmem:[%s4 + $0x70] sm:$0xff]
    %v1114 = vld [vmem:[%s4 + $0x78] sm:$0xff]
    %v1115 = vld [vmem:[%s4 + $0x80] sm:$0xff]
    %v1116 = vld [vmem:[%s4 + $0x88] sm:$0xff]
    %v1117 = vld [vmem:[%s4 + $0x90] sm:$0xff]
    %v1118 = vld [vmem:[%s4 + $0x98] sm:$0xff]
    %v1119 = vld [vmem:[%s4 + $0xa0] sm:$0xff]
    %v1120 = vld [vmem:[%s4 + $0xa8] sm:$0xff]
    %v1121 = vld [vmem:[%s4 + $0xb0] sm:$0xff]
    %v1122 = vld [vmem:[%s4 + $0xb8] sm:$0xff]
    %v1123 = vld [vmem:[%s4 + $0xc0] sm:$0xff]
    %v1124 = vld [vmem:[%s4 + $0xc8] sm:$0xff]
    %v1125 = vld [vmem:[%s4 + $0xd0] sm:$0xff]
    %v1126 = vld [vmem:[%s4 + $0xd8] sm:$0xff]
    %v1127 = vld [vmem:[%s4 + $0xe0] sm:$0xff]
    %v1128 = vld [vmem:[%s4 + $0xe8] sm:$0xff]
    %v1129 = vld [vmem:[%s4 + $0xf0] sm:$0xff]
    %v1130 = vld [vmem:[%s4 + $0xf8] sm:$0xff]
    %v1131 = vld [vmem:[%s4 + $0x100] sm:$0xff]
    %v1132 = vld [vmem:[%s4 + $0x108] sm:$0xff]
    %v1133 = vld [vmem:[%s4 + $0x110] sm:$0xff]
    %v1134 = vld [vmem:[%s4 + $0x118] sm:$0xff]
    %v1135 = vld [vmem:[%s4 + $0x120] sm:$0xff]
    %v1136 = vld [vmem:[%s4 + $0x128] sm:$0xff]
    %v1137 = vld [vmem:[%s4 + $0x130] sm:$0xff]
    %v1138 = vld [vmem:[%s4 + $0x138] sm:$0xff]
    %v1139 = vld [vmem:[%s4 + $0x140] sm:$0xff]
    %v1140 = vld [vmem:[%s4 + $0x148] sm:$0xff]
    %v1141 = vld [vmem:[%s4 + $0x150] sm:$0xff]
    %v1142 = vld [vmem:[%s4 + $0x158] sm:$0xff]
    %v1143 = vld [vmem:[%s4 + $0x160] sm:$0xff]
    %v1144 = vld [vmem:[%s4 + $0x168] sm:$0xff]
    %v1145 = vld [vmem:[%s4 + $0x170] sm:$0xff]
    %v1146 = vld [vmem:[%s4 + $0x178] sm:$0xff]
    %v1147 = vld [vmem:[%s4 + $0x180] sm:$0xff]
    %v1148 = vld [vmem:[%s4 + $0x188] sm:$0xff]
    %v1149 = vld [vmem:[%s4 + $0x190] sm:$0xff]
    %v1150 = vld [vmem:[%s4 + $0x198] sm:$0xff]
    %v1151 = vld [vmem:[%s4 + $0x1a0] sm:$0xff]
    %v1152 = vld [vmem:[%s4 + $0x1a8] sm:$0xff]
    %v1153 = vld [vmem:[%s4 + $0x1b0] sm:$0xff]
    %v1154 = vld [vmem:[%s4 + $0x1b8] sm:$0xff]
    %v1155 = vld [vmem:[%s4 + $0x1c0] sm:$0xff]
    %v1156 = vld [vmem:[%s4 + $0x1c8] sm:$0xff]
    %v1157 = vld [vmem:[%s4 + $0x1d0] sm:$0xff]
    %v1158 = vld [vmem:[%s4 + $0x1d8] sm:$0xff]
    %v1159 = vld [vmem:[%s4 + $0x1e0] sm:$0xff]
    %v1160 = vld [vmem:[%s4 + $0x1e8] sm:$0xff]
    %v1161 = vld [vmem:[%s4 + $0x1f0] sm:$0xff]
    %v1162 = vld [vmem:[%s4 + $0x1f8] sm:$0xff]
    %v1163 = vadd.f32 %v1035, %v1099
    %v1164 = vadd.f32 %v1036, %v1100
    %v1165 = vadd.f32 %v1037, %v1101
    %v1166 = vadd.f32 %v1038, %v1102
    %v1167 = vadd.f32 %v1039, %v1103
    %v1168 = vadd.f32 %v1040, %v1104
    %v1169 = vadd.f32 %v1041, %v1105
    %v1170 = vadd.f32 %v1042, %v1106
    %v1171 = vadd.f32 %v1043, %v1107
    %v1172 = vadd.f32 %v1044, %v1108
    %v1173 = vadd.f32 %v1045, %v1109
    %v1174 = vadd.f32 %v1046, %v1110
    %v1175 = vadd.f32 %v1047, %v1111
    %v1176 = vadd.f32 %v1048, %v1112
    %v1177 = vadd.f32 %v1049, %v1113
    %v1178 = vadd.f32 %v1050, %v1114
    %v1179 = vadd.f32 %v1051, %v1115
    %v1180 = vadd.f32 %v1052, %v1116
    %v1181 = vadd.f32 %v1053, %v1117
    %v1182 = vadd.f32 %v1054, %v1118
    %v1183 = vadd.f32 %v1055, %v1119
    %v1184 = vadd.f32 %v1056, %v1120
    %v1185 = vadd.f32 %v1057, %v1121
    %v1186 = vadd.f32 %v1058, %v1122
    %v1187 = vadd.f32 %v1059, %v1123
    %v1188 = vadd.f32 %v1060, %v1124
    %v1189 = vadd.f32 %v1061, %v1125
    %v1190 = vadd.f32 %v1062, %v1126
    %v1191 = vadd.f32 %v1063, %v1127
    %v1192 = vadd.f32 %v1064, %v1128
    %v1193 = vadd.f32 %v1065, %v1129
    %v1194 = vadd.f32 %v1066, %v1130
    %v1195 = vadd.f32 %v1067, %v1131
    %v1196 = vadd.f32 %v1068, %v1132
    %v1197 = vadd.f32 %v1069, %v1133
    %v1198 = vadd.f32 %v1070, %v1134
    %v1199 = vadd.f32 %v1071, %v1135
    %v1200 = vadd.f32 %v1072, %v1136
    %v1201 = vadd.f32 %v1073, %v1137
    %v1202 = vadd.f32 %v1074, %v1138
    %v1203 = vadd.f32 %v1075, %v1139
    %v1204 = vadd.f32 %v1076, %v1140
    %v1205 = vadd.f32 %v1077, %v1141
    %v1206 = vadd.f32 %v1078, %v1142
    %v1207 = vadd.f32 %v1079, %v1143
    %v1208 = vadd.f32 %v1080, %v1144
    %v1209 = vadd.f32 %v1081, %v1145
    %v1210 = vadd.f32 %v1082, %v1146
    %v1211 = vadd.f32 %v1083, %v1147
    %v1212 = vadd.f32 %v1084, %v1148
    %v1213 = vadd.f32 %v1085, %v1149
    %v1214 = vadd.f32 %v1086, %v1150
    %v1215 = vadd.f32 %v1087, %v1151
    %v1216 = vadd.f32 %v1088, %v1152
    %v1217 = vadd.f32 %v1089, %v1153
    %v1218 = vadd.f32 %v1090, %v1154
    %v1219 = vadd.f32 %v1091, %v1155
    %v1220 = vadd.f32 %v1092, %v1156
    %v1221 = vadd.f32 %v1093, %v1157
    %v1222 = vadd.f32 %v1094, %v1158
    %v1223 = vadd.f32 %v1095, %v1159
    %v1224 = vadd.f32 %v1096, %v1160
    %v1225 = vadd.f32 %v1097, %v1161
    %v1226 = vadd.f32 %v1098, %v1162
    %v1227 = vmax.f32 %v1163, 0.0
    %v1228 = vmax.f32 %v1164, 0.0
    %v1229 = vmax.f32 %v1165, 0.0
    %v1230 = vmax.f32 %v1166, 0.0
    %v1231 = vmax.f32 %v1167, 0.0
    %v1232 = vmax.f32 %v1168, 0.0
    %v1233 = vmax.f32 %v1169, 0.0
    %v1234 = vmax.f32 %v1170, 0.0
    %v1235 = vmax.f32 %v1171, 0.0
    %v1236 = vmax.f32 %v1172, 0.0
    %v1237 = vmax.f32 %v1173, 0.0
    %v1238 = vmax.f32 %v1174, 0.0
    %v1239 = vmax.f32 %v1175, 0.0
    %v1240 = vmax.f32 %v1176, 0.0
    %v1241 = vmax.f32 %v1177, 0.0
    %v1242 = vmax.f32 %v1178, 0.0
    %v1243 = vmax.f32 %v1179, 0.0
    %v1244 = vmax.f32 %v1180, 0.0
    %v1245 = vmax.f32 %v1181, 0.0
    %v1246 = vmax.f32 %v1182, 0.0
    %v1247 = vmax.f32 %v1183, 0.0
    %v1248 = vmax.f32 %v1184, 0.0
    %v1249 = vmax.f32 %v1185, 0.0
    %v1250 = vmax.f32 %v1186, 0.0
    %v1251 = vmax.f32 %v1187, 0.0
    %v1252 = vmax.f32 %v1188, 0.0
    %v1253 = vmax.f32 %v1189, 0.0
    %v1254 = vmax.f32 %v1190, 0.0
    %v1255 = vmax.f32 %v1191, 0.0
    %v1256 = vmax.f32 %v1192, 0.0
    %v1257 = vmax.f32 %v1193, 0.0
    %v1258 = vmax.f32 %v1194, 0.0
    %v1259 = vmax.f32 %v1195, 0.0
    %v1260 = vmax.f32 %v1196, 0.0
    %v1261 = vmax.f32 %v1197, 0.0
    %v1262 = vmax.f32 %v1198, 0.0
    %v1263 = vmax.f32 %v1199, 0.0
    %v1264 = vmax.f32 %v1200, 0.0
    %v1265 = vmax.f32 %v1201, 0.0
    %v1266 = vmax.f32 %v1202, 0.0
    %v1267 = vmax.f32 %v1203, 0.0
    %v1268 = vmax.f32 %v1204, 0.0
    %v1269 = vmax.f32 %v1205, 0.0
    %v1270 = vmax.f32 %v1206, 0.0
    %v1271 = vmax.f32 %v1207, 0.0
    %v1272 = vmax.f32 %v1208, 0.0
    %v1273 = vmax.f32 %v1209, 0.0
    %v1274 = vmax.f32 %v1210, 0.0
    %v1275 = vmax.f32 %v1211, 0.0
    %v1276 = vmax.f32 %v1212, 0.0
    %v1277 = vmax.f32 %v1213, 0.0
    %v1278 = vmax.f32 %v1214, 0.0
    %v1279 = vmax.f32 %v1215, 0.0
    %v1280 = vmax.f32 %v1216, 0.0
    %v1281 = vmax.f32 %v1217, 0.0
    %v1282 = vmax.f32 %v1218, 0.0
    %v1283 = vmax.f32 %v1219, 0.0
    %v1284 = vmax.f32 %v1220, 0.0
    %v1285 = vmax.f32 %v1221, 0.0
    %v1286 = vmax.f32 %v1222, 0.0
    %v1287 = vmax.f32 %v1223, 0.0
    %v1288 = vmax.f32 %v1224, 0.0
    %v1289 = vmax.f32 %v1225, 0.0
    %v1290 = vmax.f32 %v1226, 0.0
    %1291 = vst [vmem:[%s5] sm:$0xff] %v1227
    %1292 = vst [vmem:[%s5 + $0x8] sm:$0xff] %v1228
    %1293 = vst [vmem:[%s5 + $0x10] sm:$0xff] %v1229
    %1294 = vst [vmem:[%s5 + $0x18] sm:$0xff] %v1230
    %1295 = vst [vmem:[%s5 + $0x20] sm:$0xff] %v1231
    %1296 = vst [vmem:[%s5 + $0x28] sm:$0xff] %v1232
    %1297 = vst [vmem:[%s5 + $0x30] sm:$0xff] %v1233
    %1298 = vst [vmem:[%s5 + $0x38] sm:$0xff] %v1234
    %1299 = vst [vmem:[%s5 + $0x40] sm:$0xff] %v1235
    %1300 = vst [vmem:[%s5 + $0x48] sm:$0xff] %v1236
    %1301 = vst [vmem:[%s5 + $0x50] sm:$0xff] %v1237
    %1302 = vst [vmem:[%s5 + $0x58] sm:$0xff] %v1238
    %1303 = vst [vmem:[%s5 + $0x60] sm:$0xff] %v1239
    %1304 = vst [vmem:[%s5 + $0x68] sm:$0xff] %v1240
    %1305 = vst [vmem:[%s5 + $0x70] sm:$0xff] %v1241
    %1306 = vst [vmem:[%s5 + $0x78] sm:$0xff] %v1242
    %1307 = vst [vmem:[%s5 + $0x80] sm:$0xff] %v1243
    %1308 = vst [vmem:[%s5 + $0x88] sm:$0xff] %v1244
    %1309 = vst [vmem:[%s5 + $0x90] sm:$0xff] %v1245
    %1310 = vst [vmem:[%s5 + $0x98] sm:$0xff] %v1246
    %1311 = vst [vmem:[%s5 + $0xa0] sm:$0xff] %v1247
    %1312 = vst [vmem:[%s5 + $0xa8] sm:$0xff] %v1248
    %1313 = vst [vmem:[%s5 + $0xb0] sm:$0xff] %v1249
    %1314 = vst [vmem:[%s5 + $0xb8] sm:$0xff] %v1250
    %1315 = vst [vmem:[%s5 + $0xc0] sm:$0xff] %v1251
    %1316 = vst [vmem:[%s5 + $0xc8] sm:$0xff] %v1252
    %1317 = vst [vmem:[%s5 + $0xd0] sm:$0xff] %v1253
    %1318 = vst [vmem:[%s5 + $0xd8] sm:$0xff] %v1254
    %1319 = vst [vmem:[%s5 + $0xe0] sm:$0xff] %v1255
    %1320 = vst [vmem:[%s5 + $0xe8] sm:$0xff] %v1256
    %1321 = vst [vmem:[%s5 + $0xf0] sm:$0xff] %v1257
    %1322 = vst [vmem:[%s5 + $0xf8] sm:$0xff] %v1258
    %1323 = vst [vmem:[%s5 + $0x100] sm:$0xff] %v1259
    %1324 = vst [vmem:[%s5 + $0x108] sm:$0xff] %v1260
    %1325 = vst [vmem:[%s5 + $0x110] sm:$0xff] %v1261
    %1326 = vst [vmem:[%s5 + $0x118] sm:$0xff] %v1262
    %1327 = vst [vmem:[%s5 + $0x120] sm:$0xff] %v1263
    %1328 = vst [vmem:[%s5 + $0x128] sm:$0xff] %v1264
    %1329 = vst [vmem:[%s5 + $0x130] sm:$0xff] %v1265
    %1330 = vst [vmem:[%s5 + $0x138] sm:$0xff] %v1266
    %1331 = vst [vmem:[%s5 + $0x140] sm:$0xff] %v1267
    %1332 = vst [vmem:[%s5 + $0x148] sm:$0xff] %v1268
    %1333 = vst [vmem:[%s5 + $0x150] sm:$0xff] %v1269
    %1334 = vst [vmem:[%s5 + $0x158] sm:$0xff] %v1270
    %1335 = vst [vmem:[%s5 + $0x160] sm:$0xff] %v1271
    %1336 = vst [vmem:[%s5 + $0x168] sm:$0xff] %v1272
    %1337 = vst [vmem:[%s5 + $0x170] sm:$0xff] %v1273
    %1338 = vst [vmem:[%s5 + $0x178] sm:$0xff] %v1274
    %1339 = vst [vmem:[%s5 + $0x180] sm:$0xff] %v1275
    %1340 = vst [vmem:[%s5 + $0x188] sm:$0xff] %v1276
    %1341 = vst [vmem:[%s5 + $0x190] sm:$0xff] %v1277
    %1342 = vst [vmem:[%s5 + $0x198] sm:$0xff] %v1278
    %1343 = vst [vmem:[%s5 + $0x1a0] sm:$0xff] %v1279
    %1344 = vst [vmem:[%s5 + $0x1a8] sm:$0xff] %v1280
    %1345 = vst [vmem:[%s5 + $0x1b0] sm:$0xff] %v1281
    %1346 = vst [vmem:[%s5 + $0x1b8] sm:$0xff] %v1282
    %1347 = vst [vmem:[%s5 + $0x1c0] sm:$0xff] %v1283
    %1348 = vst [vmem:[%s5 + $0x1c8] sm:$0xff] %v1284
    %1349 = vst [vmem:[%s5 + $0x1d0] sm:$0xff] %v1285
    %1350 = vst [vmem:[%s5 + $0x1d8] sm:$0xff] %v1286
    %1351 = vst [vmem:[%s5 + $0x1e0] sm:$0xff] %v1287
    %1352 = vst [vmem:[%s5 + $0x1e8] sm:$0xff] %v1288
    %1353 = vst [vmem:[%s5 + $0x1f0] sm:$0xff] %v1289
    %1354 = vst [vmem:[%s5 + $0x1f8] sm:$0xff] %v1290
  $region29: #{basic_block_forward.3} parent=0 // pred_fallthru
    _
  // Predicated region
  $region30: #{basic_block_forward.3} parent=0 // pred_check
    _
  $region31: #{basic_block_forward.3} parent=0 // pred_check_branch
    %1356 = sbr.rel (0) target = $region33
  $region32: #{basic_block_forward.3} parent=0 // pred_region
    _
  $region33: #{basic_block_forward.3} parent=0 // pred_fallthru
    _
  // Predicated region
  $region34: #{basic_block_forward.3} parent=0 // pred_check
    _
  $region35: #{basic_block_forward.3} parent=0 // pred_check_branch
    %1358 = sbr.rel (0) target = $region37
  $region36: #{basic_block_forward.3} parent=0 // pred_region
    _
  $region37: #{basic_block_forward.3} parent=0 // pred_fallthru
    _

</llo_original>
